<compile_context>
chip_gen: v6e
topology: v6e:2x2x1
jax: 0.10.0
libtpu: 0.0.40
codegen_flags: <defaults>
</compile_context>

<pallas_src>
import functools

import jax
import jax.numpy as jnp
from jax.experimental import pallas as pl
from jax.experimental.pallas import tpu as pltpu

# cfg['o'] channel structure (same as 'o_low'): 32x32x3 input -> 1024-dim feature.
CFG_O = [128, 128, 'M', 256, 256, 'M', 512, 512, 'M', (1024, 0), 'M']
NUM_CLASSES = 100
CLAMP_MAX = 1.0        # rate surrogate for NewSpike_low (see TODO above)
K1_PAD = 128           # first-layer im2col K padded 27 -> 128
FC_PAD = 128           # classifier output lane-padded 100 -> 128


@functools.lru_cache(maxsize=None)
def _vmem_limit():
    """48 MiB on v7x (64 MiB physical), ~100 MiB on v5e/v6e (128 MiB physical)."""
    try:
        kind = jax.devices()[0].device_kind.lower()
    except Exception:
        return 48 * 1024 * 1024
    if "v7" in kind or "7x" in kind:
        return 48 * 1024 * 1024
    return 100 * 1024 * 1024


# ----------------------------------------------------------------------------
# Layer 1: pre-im2col'd (in XLA) matmul + bias + clamp.  K = 128 (27 useful).
# ----------------------------------------------------------------------------
def _mm_clamp_kernel(x_ref, w_ref, shift_ref, o_ref, *, clamp_max):
    acc = jnp.dot(x_ref[0], w_ref[...], preferred_element_type=jnp.float32)
    o_ref[0] = jnp.clip(acc + shift_ref[...], 0.0, clamp_max).astype(o_ref.dtype)


def matmul_clamp_block(patches, w, shift, h, wdim, clamp_max):
    """patches: (N, H*W, K1_PAD) bf16; w: (K1_PAD, Cout) bf16; shift: (1, Cout) f32."""
    n, m, k = patches.shape
    cout = w.shape[1]
    out = pl.pallas_call(
        functools.partial(_mm_clamp_kernel, clamp_max=clamp_max),
        out_shape=jax.ShapeDtypeStruct((n, m, cout), jnp.bfloat16),
        grid=(n,),
        in_specs=[
            pl.BlockSpec((1, m, k), lambda i: (i, 0, 0)),
            pl.BlockSpec((k, cout), lambda i: (0, 0)),
            pl.BlockSpec((1, cout), lambda i: (0, 0)),
        ],
        out_specs=pl.BlockSpec((1, m, cout), lambda i: (i, 0, 0)),
        compiler_params=pltpu.CompilerParams(
            dimension_semantics=("parallel",),
            vmem_limit_bytes=_vmem_limit(),
        ),
    )(patches, w, shift)
    return out.reshape(n, h, wdim, cout)


def first_layer_patches(x_nhwc):
    """Tiny 3-channel im2col in XLA: (N,H,W,3) f32 -> (N, H*W, K1_PAD) bf16."""
    n, h, w, c = x_nhwc.shape
    xp = jnp.pad(x_nhwc, ((0, 0), (1, 1), (1, 1), (0, 0)))
    taps = [xp[:, kh:kh + h, kw:kw + w, :] for kh in range(3) for kw in range(3)]
    patch = jnp.stack(taps, axis=3).reshape(n, h * w, 9 * c)     # (kh,kw,cin) order
    patch = jnp.pad(patch, ((0, 0), (0, 0), (0, K1_PAD - 9 * c)))
    return patch.astype(jnp.bfloat16)


# ----------------------------------------------------------------------------
# Fused Conv3x3(pad=1) + bias + Clamp [+ AvgPool2d(2,2)] kernel.
# Grid = (N // nb,): nb whole images per step -> M = nb*H*W for the matmul.
# ----------------------------------------------------------------------------
def _conv_clamp_kernel(x_ref, w_ref, shift_ref, o_ref, xp_ref, patch_ref, *,
                       NB, H, W, Cin, clamp_max, pool):
    dt = xp_ref.dtype
    # Zero only the halo ring (the interior is fully overwritten each step, and
    # re-zeroing every step keeps megacore batch sharding correct).
    xp_ref[:, pl.ds(0, 1), :, :] = jnp.zeros((NB, 1, W + 2, Cin), dt)
    xp_ref[:, pl.ds(H + 1, 1), :, :] = jnp.zeros((NB, 1, W + 2, Cin), dt)
    xp_ref[:, :, pl.ds(0, 1), :] = jnp.zeros((NB, H + 2, 1, Cin), dt)
    xp_ref[:, :, pl.ds(W + 1, 1), :] = jnp.zeros((NB, H + 2, 1, Cin), dt)
    xp_ref[:, pl.ds(1, H), pl.ds(1, W), :] = x_ref[...]

    # Full im2col: nine shifted slabs written straight into the patch scratch
    # with lane-aligned column stores (Cin is a multiple of 128).
    for kh in range(3):
        for kw in range(3):
            t = kh * 3 + kw
            slab = xp_ref[:, pl.ds(kh, H), pl.ds(kw, W), :]      # (NB,H,W,Cin) bf16
            patch_ref[:, pl.ds(t * Cin, Cin)] = slab.reshape(NB * H * W, Cin)

    acc = jnp.dot(patch_ref[...], w_ref[...],                    # MXU: M=NB*H*W, K=9*Cin
                  preferred_element_type=jnp.float32)
    y = jnp.clip(acc + shift_ref[...], 0.0, clamp_max)           # (M, Cout) f32
    cout = w_ref.shape[1]

    if pool:
        ho, wo = H // 2, W // 2
        # AvgPool2d(2,2) as a VPU reshape+sum (rows are ordered (b, h, w)).
        yw = y.reshape(NB * H, wo, 2, cout).sum(axis=2)          # pool over w pairs
        yh = yw.reshape(NB * ho, 2, wo, cout).sum(axis=1) * 0.25  # pool over h pairs
        o_ref[...] = yh.reshape(NB, ho, wo, cout).astype(o_ref.dtype)
    else:
        o_ref[...] = y.reshape(NB, H, W, cout).astype(o_ref.dtype)


def conv_clamp_block(x, w_flat, shift, clamp_max, pool):
    """x: (N,H,W,Cin) bf16; w_flat: (9*Cin,Cout) bf16; shift: (1,Cout) f32."""
    n, h, wdim, cin = x.shape
    cout = w_flat.shape[1]
    assert w_flat.shape[0] == 9 * cin
    assert wdim % 8 == 0 and cin % 128 == 0 and cout % 128 == 0

    # Fold several images per grid step on small feature maps so M fills the MXU.
    nb = 1
    target = max(1, 256 // (h * wdim))
    for cand in (4, 2, 1):
        if cand <= target and n % cand == 0:
            nb = cand
            break
    ho, wo = (h // 2, wdim // 2) if pool else (h, wdim)

    kernel = functools.partial(_conv_clamp_kernel, NB=nb, H=h, W=wdim, Cin=cin,
                               clamp_max=clamp_max, pool=pool)
    return pl.pallas_call(
        kernel,
        out_shape=jax.ShapeDtypeStruct((n, ho, wo, cout), jnp.bfloat16),
        grid=(n // nb,),
        in_specs=[
            pl.BlockSpec((nb, h, wdim, cin), lambda i: (i, 0, 0, 0)),
            pl.BlockSpec((9 * cin, cout), lambda i: (0, 0)),
            pl.BlockSpec((1, cout), lambda i: (0, 0)),
        ],
        out_specs=pl.BlockSpec((nb, ho, wo, cout), lambda i: (i, 0, 0, 0)),
        scratch_shapes=[
            pltpu.VMEM((nb, h + 2, wdim + 2, cin), jnp.bfloat16),   # padded input
            pltpu.VMEM((nb * h * wdim, 9 * cin), jnp.bfloat16),     # im2col patch
        ],
        compiler_params=pltpu.CompilerParams(
            dimension_semantics=("parallel",),
            vmem_limit_bytes=_vmem_limit(),
        ),
    )(x, w_flat, shift)


# ----------------------------------------------------------------------------
# Head: last conv (3x3, pad=0, 4x4x512 -> 2x2x1024) + clamp + AvgPool2d(2,2)
# + flatten + Linear(1024, 100-padded-to-128).  Grid = (2,) "parallel" over
# Cout halves (both TensorCores on v7x; halves resident head weights).
# ----------------------------------------------------------------------------
def _head_kernel(x_ref, w_ref, shift_ref, fcw_ref, o_ref, patch_ref, *,
                 N, Cin, clamp_max):
    # Vectorized im2col over batch and the 2x2 output positions:
    # patch row = n*4 + oh*2 + ow; tap t = kh*3 + kw.
    for kh in range(3):
        for kw in range(3):
            t = kh * 3 + kw
            slab = x_ref[:, pl.ds(kh, 2), pl.ds(kw, 2), :]       # (N,2,2,Cin)
            patch_ref[:, pl.ds(t * Cin, Cin)] = slab.reshape(4 * N, Cin)

    acc = jnp.dot(patch_ref[...], w_ref[...],                    # (4N, Cout/2) f32
                  preferred_element_type=jnp.float32)
    y = jnp.clip(acc + shift_ref[...], 0.0, clamp_max)
    # AvgPool2d(2,2) over the 2x2 conv output = per-image mean of 4 rows.
    feat = y.reshape(N, 4, -1).sum(axis=1) * 0.25                # (N, Cout/2)
    # Partial classifier contribution of this Cout half (bias added in XLA).
    o_ref[0] = jnp.dot(feat.astype(fcw_ref.dtype), fcw_ref[...],
                       preferred_element_type=jnp.float32).astype(o_ref.dtype)


def head_block(x, w_flat, shift, fc_w, fc_b, clamp_max):
    n, h, wdim, cin = x.shape
    assert (h, wdim) == (4, 4) and cin % 128 == 0
    cout = w_flat.shape[1]
    ncls = fc_w.shape[1]
    assert cout % 256 == 0
    half = cout // 2

    kernel = functools.partial(_head_kernel, N=n, Cin=cin, clamp_max=clamp_max)
    parts = pl.pallas_call(
        kernel,
        out_shape=jax.ShapeDtypeStruct((2, n, ncls), jnp.float32),
        grid=(2,),
        in_specs=[
            pl.BlockSpec((n, h, wdim, cin), lambda j: (0, 0, 0, 0)),
            pl.BlockSpec((9 * cin, half), lambda j: (0, j)),
            pl.BlockSpec((1, half), lambda j: (0, j)),
            pl.BlockSpec((half, ncls), lambda j: (j, 0)),
        ],
        out_specs=pl.BlockSpec((1, n, ncls), lambda j: (j, 0, 0)),
        scratch_shapes=[pltpu.VMEM((4 * n, 9 * cin), jnp.bfloat16)],
        compiler_params=pltpu.CompilerParams(
            dimension_semantics=("parallel",),
            vmem_limit_bytes=_vmem_limit(),
        ),
    )(x, w_flat, shift, fc_w)
    return parts.sum(axis=0) + fc_b                              # (N, ncls) f32


# ----------------------------------------------------------------------------
# Parameter init (deterministic, matching the module's layer shapes).
# Conv: kaiming-normal fan_in weights, uniform bias (bias=True in the module).
# Weights are stored pre-flattened in im2col order as bf16.
# ----------------------------------------------------------------------------
def init_params(key, cfg=CFG_O):
    feats = []
    in_c = 3
    first = True
    for item in cfg:
        if item == 'M':
            feats[-1]['pool'] = True          # pooling fused into preceding conv
            continue
        padding = item[1] if isinstance(item, tuple) else 1
        out_c = item[0] if isinstance(item, tuple) else item
        key, k_w, k_b = jax.random.split(key, 3)
        fan_in = in_c * 9
        w = (jax.random.normal(k_w, (3, 3, in_c, out_c), jnp.float32)
             * (2.0 / fan_in) ** 0.5)                            # HWIO
        bound = 1.0 / (fan_in ** 0.5)
        bias = jax.random.uniform(k_b, (out_c,), jnp.float32, -bound, bound)
        w_flat = w.reshape(9 * in_c, out_c)                      # im2col (kh,kw,cin)
        if first:
            # K padded 27 -> 128 with zero rows; wrapper pads the patch to match.
            w_flat = (jnp.zeros((K1_PAD, out_c), jnp.float32)
                      .at[:9 * in_c, :].set(w_flat))
            first = False
        feats.append({
            'w': w_flat.astype(jnp.bfloat16),
            'shift': bias.reshape(1, out_c),                     # conv bias (f32)
            'padding': padding,
            'pool': False,
        })
        in_c = out_c
    key, k_fc = jax.random.split(key)
    fc_w = (jax.random.normal(k_fc, (in_c, NUM_CLASSES), jnp.float32)
            * (2.0 / in_c) ** 0.5)
    fc_w = jnp.zeros((in_c, FC_PAD), jnp.float32).at[:, :NUM_CLASSES].set(fc_w)
    return {'features': feats,
            'fc_w': fc_w.astype(jnp.bfloat16),                   # lane-padded, bf16
            'fc_b': jnp.zeros((1, FC_PAD), jnp.float32)}


# ----------------------------------------------------------------------------
# Forward pass: features -> flatten -> classifier  (matches CatVGG eval forward)
# ----------------------------------------------------------------------------
def vgg_forward(params, x_nchw, clamp_max=CLAMP_MAX):
    x = jnp.transpose(x_nchw, (0, 2, 3, 1)).astype(jnp.float32)   # NCHW -> NHWC
    n, h, wdim, _ = x.shape
    feats = params['features']

    # Layer 1: tiny 3-channel im2col in XLA, K padded to 128, fused matmul+clamp.
    l1 = feats[0]
    assert l1['padding'] == 1
    x = matmul_clamp_block(first_layer_patches(x), l1['w'], l1['shift'],
                           h, wdim, clamp_max)                    # (N,32,32,128) bf16

    for layer in feats[1:-1]:
        assert layer['padding'] == 1
        x = conv_clamp_block(x, layer['w'], layer['shift'], clamp_max, layer['pool'])
        # nn.Dropout2d(0): identity at inference

    last = feats[-1]
    assert last['padding'] == 0 and last['pool']
    logits = head_block(x, last['w'], last['shift'],
                        params['fc_w'], params['fc_b'], clamp_max)
    return logits[:, :NUM_CLASSES]                                # drop lane padding


if __name__ == "__main__":
    key = jax.random.PRNGKey(0)
    k_param, k_x = jax.random.split(key)
    params = init_params(k_param, CFG_O)
    # CIFAR-like input, small batch (NCHW, as in PyTorch).
    x = jax.random.normal(k_x, (2, 3, 32, 32), jnp.float32)
    out = vgg_forward(params, x)
    out = jax.block_until_ready(out)
    assert out.shape == (2, NUM_CLASSES), out.shape
    assert out.dtype == jnp.float32
    print("KERNEL_OK")
</pallas_src>

<mosaic_0001>
module attributes {stable_mosaic.version = 11 : i64} {
  func.func @_mm_clamp_kernel(%arg0: i32, %arg1: memref<1x1024x128xbf16, #tpu.memory_space<vmem>>, %arg2: memref<128x128xbf16, #tpu.memory_space<vmem>>, %arg3: memref<1x128xf32, #tpu.memory_space<vmem>>, %arg4: memref<1x1024x128xbf16, #tpu.memory_space<vmem>>) attributes {dimension_semantics = [#tpu.dimension_semantics<parallel>], iteration_bounds = array<i64: 2>, scalar_prefetch = 0 : i64, scratch_operands = 0 : i64, tpu.core_type = #tpu.core_type<tc>, window_params = [{transform_indices = @transform_0, window_bounds = array<i64: 1, 1024, 128>}, {pipeline_mode = #tpu.pipeline_mode<synchronous>, transform_indices = @transform_1, window_bounds = array<i64: 128, 128>}, {pipeline_mode = #tpu.pipeline_mode<synchronous>, transform_indices = @transform_2, window_bounds = array<i64: 1, 128>}, {transform_indices = @transform_3, window_bounds = array<i64: 1, 1024, 128>}]} {
    %c0 = arith.constant 0 : index
    %c0_0 = arith.constant 0 : index
    %c0_1 = arith.constant 0 : index
    %0 = vector.load %arg1[%c0, %c0_0, %c0_1] : memref<1x1024x128xbf16, #tpu.memory_space<vmem>>, vector<1x1024x128xbf16>
    %1 = vector.shape_cast %0 : vector<1x1024x128xbf16> to vector<1024x128xbf16>
    %c0_2 = arith.constant 0 : index
    %c0_3 = arith.constant 0 : index
    %2 = vector.load %arg2[%c0_2, %c0_3] : memref<128x128xbf16, #tpu.memory_space<vmem>>, vector<128x128xbf16>
    %cst = arith.constant dense<0.000000e+00> : vector<1024x128xf32>
    %3 = tpu.matmul %1, %2, %cst {dimension_numbers = #tpu.dot_dimension_numbers<[1], [0], [0], [1], [0, 0, 1, 1], [], []>} : vector<1024x128xbf16>, vector<128x128xbf16>, vector<1024x128xf32> -> vector<1024x128xf32>
    %c0_4 = arith.constant 0 : index
    %c0_5 = arith.constant 0 : index
    %4 = vector.load %arg3[%c0_4, %c0_5] : memref<1x128xf32, #tpu.memory_space<vmem>>, vector<1x128xf32>
    %5 = vector.broadcast %4 : vector<1x128xf32> to vector<1024x128xf32>
    %6 = arith.addf %3, %5 : vector<1024x128xf32>
    %cst_6 = arith.constant 0.000000e+00 : f32
    %cst_7 = arith.constant 1.000000e+00 : f32
    %7 = vector.broadcast %cst_6 : f32 to vector<1024x128xf32>
    %8 = arith.maximumf %7, %6 : vector<1024x128xf32>
    %9 = vector.broadcast %cst_7 : f32 to vector<1024x128xf32>
    %10 = arith.minimumf %9, %8 : vector<1024x128xf32>
    %11 = arith.truncf %10 : vector<1024x128xf32> to vector<1024x128xbf16>
    %c0_8 = arith.constant 0 : index
    %c0_9 = arith.constant 0 : index
    %c0_10 = arith.constant 0 : index
    %12 = vector.load %arg4[%c0_8, %c0_9, %c0_10] : memref<1x1024x128xbf16, #tpu.memory_space<vmem>>, vector<1x1024x128xbf16>
    %13 = vector.shape_cast %12 : vector<1x1024x128xbf16> to vector<1024x128xbf16>
    %14 = vector.shape_cast %11 : vector<1024x128xbf16> to vector<1x1024x128xbf16>
    tpu.vector_store %arg4[%c0_8, %c0_9, %c0_10], %14 {strides = array<i32>} : memref<1x1024x128xbf16, #tpu.memory_space<vmem>>, vector<1x1024x128xbf16>,
    return
  }
  func.func @transform_0(%arg0: i32) -> (i32, i32, i32) {
    %c0_i32 = arith.constant 0 : i32
    %c0_i32_0 = arith.constant 0 : i32
    %c0_i32_1 = arith.constant 0 : i32
    return %arg0, %c0_i32, %c0_i32_0 : i32, i32, i32
  }
  func.func @transform_1(%arg0: i32) -> (i32, i32) {
    %c0_i32 = arith.constant 0 : i32
    %c0_i32_0 = arith.constant 0 : i32
    %c0_i32_1 = arith.constant 0 : i32
    return %c0_i32, %c0_i32_0 : i32, i32
  }
  func.func @transform_2(%arg0: i32) -> (i32, i32) {
    %c0_i32 = arith.constant 0 : i32
    %c0_i32_0 = arith.constant 0 : i32
    %c0_i32_1 = arith.constant 0 : i32
    return %c0_i32, %c0_i32_0 : i32, i32
  }
  func.func @transform_3(%arg0: i32) -> (i32, i32, i32) {
    %c0_i32 = arith.constant 0 : i32
    %c0_i32_0 = arith.constant 0 : i32
    %c0_i32_1 = arith.constant 0 : i32
    return %arg0, %c0_i32, %c0_i32_0 : i32, i32, i32
  }
}

</mosaic_0001>

<llo_original>
// kernel: tpu_custom_call.1
$region0: #{tpu_custom_call.1}
  #allocation0 [shape = 'u32[]', space=smem, size = 0x4, offset = 0x4, fixed_abs, tag = 'smem constant byte address 0x4 - core index']
  #allocation1 [shape = 'u32[144,128]{1,0:T(1,128)}', space=vmem, size = 0x12000, scoped, tag = 'internal scratch']
  %s0 = inlined_call_operand.hbm [shape: bf16[2,1024,128], index: 0, kind: input, shape index: {}]
  %s1 = inlined_call_operand.hbm [shape: bf16[128,128], index: 1, kind: input, shape index: {}]
  %s2 = inlined_call_operand.vmem [shape: f32[1,128], index: 2, kind: input, shape index: {}]
  %s3 = inlined_call_operand.hbm [shape: bf16[2,1024,128], index: 3, kind: output, shape index: {}]
  %s4 = sld [smem:[#allocation0]]
  $region53: #{tpu_custom_call.1} parent=0
    _
  %s6 = ssub.s32 1, %s4
  %s7 = scalar_select 0, %s6, %s4
  $region1: #{tpu_custom_call.1} parent=0
    #allocation2 [shape = 'u8[524288]{0}', space=vmem, size = 0x80000, scoped, tag = 'input window, operand 0']
    #allocation3 [shape = 's32[2]{0}', space=sflag, size = 0x8, scoped, tag = 'scoped memory for tpu_custom_call.1']
    #allocation4 [shape = 's32[2]{0}', space=sflag, size = 0x8, scoped, tag = 'scoped memory for tpu_custom_call.1']
    #allocation5 [shape = 'u8[32768]{0}', space=vmem, size = 0x8000, scoped, tag = 'input window, operand 1, single buffered']
    #allocation6 [shape = 's32[1]{0}', space=sflag, size = 0x4, scoped, tag = 'scoped memory for tpu_custom_call.1']
    #allocation7 [shape = 'u8[524288]{0}', space=vmem, size = 0x80000, scoped, tag = 'output window, operand 0']
    %8 = vsyncpa [#allocation3], 0
    %s9 = scalar_lea.sflag [#allocation3], 1
    %10 = vsyncpa %s9, 0
    %11 = vsyncpa [#allocation6], 0
    %12 = vsyncpa [#allocation4], 0
    %s13 = scalar_lea.sflag [#allocation4], 1
    %14 = vsyncpa %s13, 0
    loop: start=0, step=1, limit=4
    $region2: #{tpu_custom_call.1} parent=1 // loop_pre_header
      _
    $region3: #{tpu_custom_call.1} parent=1 // loop_header
      %s16 = sphi 0, %s20
      %p17 = scmp.ge.s32.totalorder %s16, 4
      %s26 = sphi 0, %s28
      %s29 = sphi 0, %s26
      %s30 = sphi 0, %s29
      %s46 = sphi 0, %s30
      %s50 = sphi 0, %s50
      %s52 = sphi 0, %s50
      %s53 = sphi 0, %s52
      %s67 = sphi 0, %s53
      %s71 = sphi 0, %s71
      %s73 = sphi 0, %s71
      %s74 = sphi 0, %s73
      %s88 = sphi 0, %s74
      %s94 = sphi 0, %s96
      %s97 = sphi 0, %s94
      %s98 = sphi 0, %s97
      %s114 = sphi 0, %s98
    $region4: #{tpu_custom_call.1} parent=1 // loop_header_branch
      %19 = sbr.rel (%p17) target = $region8
    $region5: #{tpu_custom_call.1} parent=1 // loop_body
      %s21 = ssub.s32 %s16, 1
      %s22 = ssub.s32 %s16, 2
      %s23 = sadd.s32 %s16, 1
      %s24 = ssub.s32 %s16, %s23
      %p25 = scmp.eq.s32.totalorder %s24, 0
      %s27 = sadd.s32 %s26, 1
      %s28 = scalar_select %p25, %s26, %s27
      %p31 = pneg %p25
      %p32 = scmp.eq.s32.totalorder %s16, 1
      %p33 = por %p31, %p32
      %p34 = scmp.ne.s32.totalorder %s26, %s29
      %p35 = scmp.eq.s32.totalorder %s16, 0
      %p36 = por %p34, %p35
      %p37 = scmp.ne.s32.totalorder %s26, %s29
      %p38 = scmp.eq.s32.totalorder %s21, 1
      %p39 = por %p37, %p38
      %p40 = scmp.ne.s32.totalorder %s29, %s30
      %p41 = scmp.eq.s32.totalorder %s21, 0
      %p42 = por %p40, %p41
      %p43 = scmp.ne.s32.totalorder %s29, %s30
      %p44 = scmp.eq.s32.totalorder %s22, 1
      %p45 = por %p43, %p44
      %p47 = scmp.ne.s32.totalorder %s30, %s46
      %p48 = scmp.eq.s32.totalorder %s22, 0
      %p49 = por %p47, %p48
      %s51 = sadd.s32 %s50, 1
      %p54 = scmp.eq.s32.totalorder %s16, 1
      %p55 = scmp.ne.s32.totalorder %s50, %s52
      %p56 = scmp.eq.s32.totalorder %s16, 0
      %p57 = por %p55, %p56
      %p58 = scmp.ne.s32.totalorder %s50, %s52
      %p59 = scmp.eq.s32.totalorder %s21, 1
      %p60 = por %p58, %p59
      %p61 = scmp.ne.s32.totalorder %s52, %s53
      %p62 = scmp.eq.s32.totalorder %s21, 0
      %p63 = por %p61, %p62
      %p64 = scmp.ne.s32.totalorder %s52, %s53
      %p65 = scmp.eq.s32.totalorder %s22, 1
      %p66 = por %p64, %p65
      %p68 = scmp.ne.s32.totalorder %s53, %s67
      %p69 = scmp.eq.s32.totalorder %s22, 0
      %p70 = por %p68, %p69
      %s72 = sadd.s32 %s71, 1
      %p75 = scmp.eq.s32.totalorder %s16, 1
      %p76 = scmp.ne.s32.totalorder %s71, %s73
      %p77 = scmp.eq.s32.totalorder %s16, 0
      %p78 = por %p76, %p77
      %p79 = scmp.ne.s32.totalorder %s71, %s73
      %p80 = scmp.eq.s32.totalorder %s21, 1
      %p81 = por %p79, %p80
      %p82 = scmp.ne.s32.totalorder %s73, %s74
      %p83 = scmp.eq.s32.totalorder %s21, 0
      %p84 = por %p82, %p83
      %p85 = scmp.ne.s32.totalorder %s73, %s74
      %p86 = scmp.eq.s32.totalorder %s22, 1
      %p87 = por %p85, %p86
      %p89 = scmp.ne.s32.totalorder %s74, %s88
      %p90 = scmp.eq.s32.totalorder %s22, 0
      %p91 = por %p89, %p90
      %s92 = ssub.s32 %s16, %s23
      %p93 = scmp.eq.s32.totalorder %s92, 0
      %s95 = sadd.s32 %s94, 1
      %s96 = scalar_select %p93, %s94, %s95
      %p99 = pneg %p93
      %p100 = scmp.eq.s32.totalorder %s16, 1
      %p101 = por %p99, %p100
      %p102 = scmp.ne.s32.totalorder %s94, %s97
      %p103 = scmp.eq.s32.totalorder %s16, 0
      %p104 = por %p102, %p103
      %p105 = scmp.ne.s32.totalorder %s94, %s97
      %p106 = scmp.eq.s32.totalorder %s21, 1
      %p107 = por %p105, %p106
      %p108 = scmp.ne.s32.totalorder %s97, %s98
      %p109 = scmp.eq.s32.totalorder %s21, 0
      %p110 = por %p108, %p109
      %p111 = scmp.ne.s32.totalorder %s97, %s98
      %p112 = scmp.eq.s32.totalorder %s22, 1
      %p113 = por %p111, %p112
      %p115 = scmp.ne.s32.totalorder %s98, %s114
      %p116 = scmp.eq.s32.totalorder %s22, 0
      %p117 = por %p115, %p116
      %p118 = scmp.le.s32.totalorder 1, %s16
      %p119 = scmp.lt.s32.totalorder %s16, 3
      %p120 = pnand %p118, %p119
      %p121 = pneg %p120
      // Predicated region
      $region9: #{tpu_custom_call.1} parent=5 // pred_check
        _
      $region10: #{tpu_custom_call.1} parent=5 // pred_check_branch
        %123 = sbr.rel (%p120) target = $region12
      $region11: #{tpu_custom_call.1} parent=5 // pred_region
        %s124 = ssub.s32 %s16, 1
        // Predicated region
        $region13: #{tpu_custom_call.1} parent=11 // pred_check
          %p125 = pneg %p63
        $region14: #{tpu_custom_call.1} parent=11 // pred_check_branch
          %127 = sbr.rel (%p125) target = $region16
        $region15: #{tpu_custom_call.1} parent=11 // pred_region
          %s129 = ssub.s32 1024, 1024
          %130 = vsyncadd [#allocation6], %s129
          %s131 = sshll.u32 [#allocation5], 4
          %s132 = int_to_ptr.vmem [resolvable:$true] %s131
          %137 = dma.hbm_to_vmem [thread:$0]  %s1, 1024, %s132, [#allocation6], 64, 64, 4
        $region16: #{tpu_custom_call.1} parent=11 // pred_fallthru
          _
        // Predicated region
        $region17: #{tpu_custom_call.1} parent=11 // pred_check
          %p138 = pneg %p84
        $region18: #{tpu_custom_call.1} parent=11 // pred_check_branch
          %140 = sbr.rel (%p138) target = $region20
        $region19: #{tpu_custom_call.1} parent=11 // pred_region
          _
        $region20: #{tpu_custom_call.1} parent=11 // pred_fallthru
          _
      $region12: #{tpu_custom_call.1} parent=5 // pred_fallthru
        _
      %p141 = scmp.lt.s32.totalorder %s16, 2
      // Predicated region
      $region21: #{tpu_custom_call.1} parent=5 // pred_check
        %p142 = pneg %p141
      $region22: #{tpu_custom_call.1} parent=5 // pred_check_branch
        %144 = sbr.rel (%p142) target = $region24
      $region23: #{tpu_custom_call.1} parent=5 // pred_region
        // Predicated region
        $region25: #{tpu_custom_call.1} parent=23 // pred_check
          %p145 = pneg %p36
        $region26: #{tpu_custom_call.1} parent=23 // pred_check_branch
          %147 = sbr.rel (%p145) target = $region28
        $region27: #{tpu_custom_call.1} parent=23 // pred_region
          %s148 = sand.u32 %s26, 1
          %s149 = scalar_lea.sflag [#allocation3], %s148
          %s150 = sand.u32 %s26, 1
          %s151 = smul.addr %s150, 512
          %s152 = scalar_lea.vmem [#allocation2], %s151
          %s154 = ssub.s32 8192, 8192
          %155 = vsyncadd %s149, %s154
          %s156 = smul.addr %s16, 128
          %s157 = smul.addr %s156, 64
          %s158 = scalar_lea.hbm %s0, %s157
          %s159 = sshll.u32 %s152, 4
          %s160 = int_to_ptr.vmem [resolvable:$true] %s159
          %165 = dma.hbm_to_vmem [thread:$0]  %s158, 8192, %s160, %s149, 64, 64, 4
        $region28: #{tpu_custom_call.1} parent=23 // pred_fallthru
          _
      $region24: #{tpu_custom_call.1} parent=5 // pred_fallthru
        _
      %p166 = scmp.le.s32.totalorder 1, %s16
      %p167 = scmp.lt.s32.totalorder %s16, 3
      %p168 = pnand %p166, %p167
      %p169 = pneg %p168
      // Predicated region
      $region29: #{tpu_custom_call.1} parent=5 // pred_check
        _
      $region30: #{tpu_custom_call.1} parent=5 // pred_check_branch
        %171 = sbr.rel (%p168) target = $region32
      $region31: #{tpu_custom_call.1} parent=5 // pred_region
        %s172 = ssub.s32 %s16, 1
        %s173 = sand.u32 %s29, 1
        %s174 = scalar_lea.sflag [#allocation3], %s173
        %s175 = sand.u32 %s29, 1
        %s176 = smul.addr %s175, 512
        %s177 = scalar_lea.vmem [#allocation2], %s176
        // Predicated region
        $region33: #{tpu_custom_call.1} parent=31 // pred_check
          %p178 = pneg %p42
        $region34: #{tpu_custom_call.1} parent=31 // pred_check_branch
          %180 = sbr.rel (%p178) target = $region36
        $region35: #{tpu_custom_call.1} parent=31 // pred_region
          %181 = dma.done %s174, 8192
        $region36: #{tpu_custom_call.1} parent=31 // pred_fallthru
          _
        // Predicated region
        $region37: #{tpu_custom_call.1} parent=31 // pred_check
          %p182 = pneg %p63
        $region38: #{tpu_custom_call.1} parent=31 // pred_check_branch
          %184 = sbr.rel (%p182) target = $region40
        $region39: #{tpu_custom_call.1} parent=31 // pred_region
          %185 = dma.done [#allocation6], 1024
        $region40: #{tpu_custom_call.1} parent=31 // pred_fallthru
          _
        %s186 = sand.u32 %s29, 1
        %s187 = scalar_lea.sflag [#allocation3], %s186
        %s188 = sand.u32 %s29, 1
        %s189 = smul.addr %s188, 512
        %s190 = scalar_lea.vmem [#allocation2], %s189
        %p191 = pneg %p42
        %p192 = pneg %p39
        %p193 = pneg %p63
        %p194 = pneg %p60
        %p195 = pneg %p84
        %p196 = pneg %p81
        %p197 = pneg %p110
        %p198 = pneg %p107
        %s199 = sand.u32 %s97, 1
        %s200 = scalar_lea.sflag [#allocation4], %s199
        %s201 = sand.u32 %s97, 1
        %s202 = smul.addr %s201, 512
        %s203 = scalar_lea.vmem [#allocation7], %s202
        %v205 = vld [vmem:[%s177] sm:$0xf]
        %v206 = vld [vmem:[%s177 + $0x4] sm:$0xf]
        %v207 = vld [vmem:[%s177 + $0x8] sm:$0xf]
        %v208 = vld [vmem:[%s177 + $0xc] sm:$0xf]
        %v209 = vld [vmem:[%s177 + $0x10] sm:$0xf]
        %v210 = vld [vmem:[%s177 + $0x14] sm:$0xf]
        %v211 = vld [vmem:[%s177 + $0x18] sm:$0xf]
        %v212 = vld [vmem:[%s177 + $0x1c] sm:$0xf]
        %v213 = vld [vmem:[%s177 + $0x20] sm:$0xf]
        %v214 = vld [vmem:[%s177 + $0x24] sm:$0xf]
        %v215 = vld [vmem:[%s177 + $0x28] sm:$0xf]
        %v216 = vld [vmem:[%s177 + $0x2c] sm:$0xf]
        %v217 = vld [vmem:[%s177 + $0x30] sm:$0xf]
        %v218 = vld [vmem:[%s177 + $0x34] sm:$0xf]
        %v219 = vld [vmem:[%s177 + $0x38] sm:$0xf]
        %v220 = vld [vmem:[%s177 + $0x3c] sm:$0xf]
        %v221 = vld [vmem:[%s177 + $0x40] sm:$0xf]
        %v222 = vld [vmem:[%s177 + $0x44] sm:$0xf]
        %v223 = vld [vmem:[%s177 + $0x48] sm:$0xf]
        %v224 = vld [vmem:[%s177 + $0x4c] sm:$0xf]
        %v225 = vld [vmem:[%s177 + $0x50] sm:$0xf]
        %v226 = vld [vmem:[%s177 + $0x54] sm:$0xf]
        %v227 = vld [vmem:[%s177 + $0x58] sm:$0xf]
        %v228 = vld [vmem:[%s177 + $0x5c] sm:$0xf]
        %v229 = vld [vmem:[%s177 + $0x60] sm:$0xf]
        %v230 = vld [vmem:[%s177 + $0x64] sm:$0xf]
        %v231 = vld [vmem:[%s177 + $0x68] sm:$0xf]
        %v232 = vld [vmem:[%s177 + $0x6c] sm:$0xf]
        %v233 = vld [vmem:[%s177 + $0x70] sm:$0xf]
        %v234 = vld [vmem:[%s177 + $0x74] sm:$0xf]
        %v235 = vld [vmem:[%s177 + $0x78] sm:$0xf]
        %v236 = vld [vmem:[%s177 + $0x7c] sm:$0xf]
        %v237 = vld [vmem:[%s177 + $0x80] sm:$0xf]
        %v238 = vld [vmem:[%s177 + $0x84] sm:$0xf]
        %v239 = vld [vmem:[%s177 + $0x88] sm:$0xf]
        %v240 = vld [vmem:[%s177 + $0x8c] sm:$0xf]
        %v241 = vld [vmem:[%s177 + $0x90] sm:$0xf]
        %v242 = vld [vmem:[%s177 + $0x94] sm:$0xf]
        %v243 = vld [vmem:[%s177 + $0x98] sm:$0xf]
        %v244 = vld [vmem:[%s177 + $0x9c] sm:$0xf]
        %v245 = vld [vmem:[%s177 + $0xa0] sm:$0xf]
        %v246 = vld [vmem:[%s177 + $0xa4] sm:$0xf]
        %v247 = vld [vmem:[%s177 + $0xa8] sm:$0xf]
        %v248 = vld [vmem:[%s177 + $0xac] sm:$0xf]
        %v249 = vld [vmem:[%s177 + $0xb0] sm:$0xf]
        %v250 = vld [vmem:[%s177 + $0xb4] sm:$0xf]
        %v251 = vld [vmem:[%s177 + $0xb8] sm:$0xf]
        %v252 = vld [vmem:[%s177 + $0xbc] sm:$0xf]
        %v253 = vld [vmem:[%s177 + $0xc0] sm:$0xf]
        %v254 = vld [vmem:[%s177 + $0xc4] sm:$0xf]
        %v255 = vld [vmem:[%s177 + $0xc8] sm:$0xf]
        %v256 = vld [vmem:[%s177 + $0xcc] sm:$0xf]
        %v257 = vld [vmem:[%s177 + $0xd0] sm:$0xf]
        %v258 = vld [vmem:[%s177 + $0xd4] sm:$0xf]
        %v259 = vld [vmem:[%s177 + $0xd8] sm:$0xf]
        %v260 = vld [vmem:[%s177 + $0xdc] sm:$0xf]
        %v261 = vld [vmem:[%s177 + $0xe0] sm:$0xf]
        %v262 = vld [vmem:[%s177 + $0xe4] sm:$0xf]
        %v263 = vld [vmem:[%s177 + $0xe8] sm:$0xf]
        %v264 = vld [vmem:[%s177 + $0xec] sm:$0xf]
        %v265 = vld [vmem:[%s177 + $0xf0] sm:$0xf]
        %v266 = vld [vmem:[%s177 + $0xf4] sm:$0xf]
        %v267 = vld [vmem:[%s177 + $0xf8] sm:$0xf]
        %v268 = vld [vmem:[%s177 + $0xfc] sm:$0xf]
        %v269 = vld [vmem:[%s177 + $0x100] sm:$0xf]
        %v270 = vld [vmem:[%s177 + $0x104] sm:$0xf]
        %v271 = vld [vmem:[%s177 + $0x108] sm:$0xf]
        %v272 = vld [vmem:[%s177 + $0x10c] sm:$0xf]
        %v273 = vld [vmem:[%s177 + $0x110] sm:$0xf]
        %v274 = vld [vmem:[%s177 + $0x114] sm:$0xf]
        %v275 = vld [vmem:[%s177 + $0x118] sm:$0xf]
        %v276 = vld [vmem:[%s177 + $0x11c] sm:$0xf]
        %v277 = vld [vmem:[%s177 + $0x120] sm:$0xf]
        %v278 = vld [vmem:[%s177 + $0x124] sm:$0xf]
        %v279 = vld [vmem:[%s177 + $0x128] sm:$0xf]
        %v280 = vld [vmem:[%s177 + $0x12c] sm:$0xf]
        %v281 = vld [vmem:[%s177 + $0x130] sm:$0xf]
        %v282 = vld [vmem:[%s177 + $0x134] sm:$0xf]
        %v283 = vld [vmem:[%s177 + $0x138] sm:$0xf]
        %v284 = vld [vmem:[%s177 + $0x13c] sm:$0xf]
        %v285 = vld [vmem:[%s177 + $0x140] sm:$0xf]
        %v286 = vld [vmem:[%s177 + $0x144] sm:$0xf]
        %v287 = vld [vmem:[%s177 + $0x148] sm:$0xf]
        %v288 = vld [vmem:[%s177 + $0x14c] sm:$0xf]
        %v289 = vld [vmem:[%s177 + $0x150] sm:$0xf]
        %v290 = vld [vmem:[%s177 + $0x154] sm:$0xf]
        %v291 = vld [vmem:[%s177 + $0x158] sm:$0xf]
        %v292 = vld [vmem:[%s177 + $0x15c] sm:$0xf]
        %v293 = vld [vmem:[%s177 + $0x160] sm:$0xf]
        %v294 = vld [vmem:[%s177 + $0x164] sm:$0xf]
        %v295 = vld [vmem:[%s177 + $0x168] sm:$0xf]
        %v296 = vld [vmem:[%s177 + $0x16c] sm:$0xf]
        %v297 = vld [vmem:[%s177 + $0x170] sm:$0xf]
        %v298 = vld [vmem:[%s177 + $0x174] sm:$0xf]
        %v299 = vld [vmem:[%s177 + $0x178] sm:$0xf]
        %v300 = vld [vmem:[%s177 + $0x17c] sm:$0xf]
        %v301 = vld [vmem:[%s177 + $0x180] sm:$0xf]
        %v302 = vld [vmem:[%s177 + $0x184] sm:$0xf]
        %v303 = vld [vmem:[%s177 + $0x188] sm:$0xf]
        %v304 = vld [vmem:[%s177 + $0x18c] sm:$0xf]
        %v305 = vld [vmem:[%s177 + $0x190] sm:$0xf]
        %v306 = vld [vmem:[%s177 + $0x194] sm:$0xf]
        %v307 = vld [vmem:[%s177 + $0x198] sm:$0xf]
        %v308 = vld [vmem:[%s177 + $0x19c] sm:$0xf]
        %v309 = vld [vmem:[%s177 + $0x1a0] sm:$0xf]
        %v310 = vld [vmem:[%s177 + $0x1a4] sm:$0xf]
        %v311 = vld [vmem:[%s177 + $0x1a8] sm:$0xf]
        %v312 = vld [vmem:[%s177 + $0x1ac] sm:$0xf]
        %v313 = vld [vmem:[%s177 + $0x1b0] sm:$0xf]
        %v314 = vld [vmem:[%s177 + $0x1b4] sm:$0xf]
        %v315 = vld [vmem:[%s177 + $0x1b8] sm:$0xf]
        %v316 = vld [vmem:[%s177 + $0x1bc] sm:$0xf]
        %v317 = vld [vmem:[%s177 + $0x1c0] sm:$0xf]
        %v318 = vld [vmem:[%s177 + $0x1c4] sm:$0xf]
        %v319 = vld [vmem:[%s177 + $0x1c8] sm:$0xf]
        %v320 = vld [vmem:[%s177 + $0x1cc] sm:$0xf]
        %v321 = vld [vmem:[%s177 + $0x1d0] sm:$0xf]
        %v322 = vld [vmem:[%s177 + $0x1d4] sm:$0xf]
        %v323 = vld [vmem:[%s177 + $0x1d8] sm:$0xf]
        %v324 = vld [vmem:[%s177 + $0x1dc] sm:$0xf]
        %v325 = vld [vmem:[%s177 + $0x1e0] sm:$0xf]
        %v326 = vld [vmem:[%s177 + $0x1e4] sm:$0xf]
        %v327 = vld [vmem:[%s177 + $0x1e8] sm:$0xf]
        %v328 = vld [vmem:[%s177 + $0x1ec] sm:$0xf]
        %v329 = vld [vmem:[%s177 + $0x1f0] sm:$0xf]
        %v330 = vld [vmem:[%s177 + $0x1f4] sm:$0xf]
        %v331 = vld [vmem:[%s177 + $0x1f8] sm:$0xf]
        %v332 = vld [vmem:[%s177 + $0x1fc] sm:$0xf]
        %v333 = vld [vmem:[#allocation5] sm:$0xf]
        %v334 = vld [vmem:[#allocation5 + $0x4] sm:$0xf]
        %v335 = vld [vmem:[#allocation5 + $0x8] sm:$0xf]
        %v336 = vld [vmem:[#allocation5 + $0xc] sm:$0xf]
        %v337 = vld [vmem:[#allocation5 + $0x10] sm:$0xf]
        %v338 = vld [vmem:[#allocation5 + $0x14] sm:$0xf]
        %v339 = vld [vmem:[#allocation5 + $0x18] sm:$0xf]
        %v340 = vld [vmem:[#allocation5 + $0x1c] sm:$0xf]
        %v341 = vld [vmem:[#allocation5 + $0x20] sm:$0xf]
        %v342 = vld [vmem:[#allocation5 + $0x24] sm:$0xf]
        %v343 = vld [vmem:[#allocation5 + $0x28] sm:$0xf]
        %v344 = vld [vmem:[#allocation5 + $0x2c] sm:$0xf]
        %v345 = vld [vmem:[#allocation5 + $0x30] sm:$0xf]
        %v346 = vld [vmem:[#allocation5 + $0x34] sm:$0xf]
        %v347 = vld [vmem:[#allocation5 + $0x38] sm:$0xf]
        %v348 = vld [vmem:[#allocation5 + $0x3c] sm:$0xf]
        %v349 = vld [vmem:[%s2] sm:$0x1]
        %v351 = vlaneseq
        %v352 = vshrl.u32 %v351, 7
        %v353 = vsub.s32 0, %v352
        %v354 = vrot.slane %v349, %v353
        %v484 = vunpack.c.l.b16 %v205
        %v485 = vunpack.c.l.b16 %v206
        %v486 = vunpack.c.l.b16 %v207
        %v487 = vunpack.c.l.b16 %v208
        %v488 = vunpack.c.l.b16 %v209
        %v489 = vunpack.c.l.b16 %v210
        %v490 = vunpack.c.l.b16 %v211
        %v491 = vunpack.c.l.b16 %v212
        %v492 = vunpack.c.l.b16 %v213
        %v493 = vunpack.c.l.b16 %v214
        %v494 = vunpack.c.l.b16 %v215
        %v495 = vunpack.c.l.b16 %v216
        %v496 = vunpack.c.l.b16 %v217
        %v497 = vunpack.c.l.b16 %v218
        %v498 = vunpack.c.l.b16 %v219
        %v499 = vunpack.c.l.b16 %v220
        %v500 = vunpack.c.l.b16 %v221
        %v501 = vunpack.c.l.b16 %v222
        %v502 = vunpack.c.l.b16 %v223
        %v503 = vunpack.c.l.b16 %v224
        %v504 = vunpack.c.l.b16 %v225
        %v505 = vunpack.c.l.b16 %v226
        %v506 = vunpack.c.l.b16 %v227
        %v507 = vunpack.c.l.b16 %v228
        %v508 = vunpack.c.l.b16 %v229
        %v509 = vunpack.c.l.b16 %v230
        %v510 = vunpack.c.l.b16 %v231
        %v511 = vunpack.c.l.b16 %v232
        %v512 = vunpack.c.l.b16 %v233
        %v513 = vunpack.c.l.b16 %v234
        %v514 = vunpack.c.l.b16 %v235
        %v515 = vunpack.c.l.b16 %v236
        %v516 = vunpack.c.l.b16 %v237
        %v517 = vunpack.c.l.b16 %v238
        %v518 = vunpack.c.l.b16 %v239
        %v519 = vunpack.c.l.b16 %v240
        %v520 = vunpack.c.l.b16 %v241
        %v521 = vunpack.c.l.b16 %v242
        %v522 = vunpack.c.l.b16 %v243
        %v523 = vunpack.c.l.b16 %v244
        %v524 = vunpack.c.l.b16 %v245
        %v525 = vunpack.c.l.b16 %v246
        %v526 = vunpack.c.l.b16 %v247
        %v527 = vunpack.c.l.b16 %v248
        %v528 = vunpack.c.l.b16 %v249
        %v529 = vunpack.c.l.b16 %v250
        %v530 = vunpack.c.l.b16 %v251
        %v531 = vunpack.c.l.b16 %v252
        %v532 = vunpack.c.l.b16 %v253
        %v533 = vunpack.c.l.b16 %v254
        %v534 = vunpack.c.l.b16 %v255
        %v535 = vunpack.c.l.b16 %v256
        %v536 = vunpack.c.l.b16 %v257
        %v537 = vunpack.c.l.b16 %v258
        %v538 = vunpack.c.l.b16 %v259
        %v539 = vunpack.c.l.b16 %v260
        %v540 = vunpack.c.l.b16 %v261
        %v541 = vunpack.c.l.b16 %v262
        %v542 = vunpack.c.l.b16 %v263
        %v543 = vunpack.c.l.b16 %v264
        %v544 = vunpack.c.l.b16 %v265
        %v545 = vunpack.c.l.b16 %v266
        %v546 = vunpack.c.l.b16 %v267
        %v547 = vunpack.c.l.b16 %v268
        %v548 = vunpack.c.l.b16 %v269
        %v549 = vunpack.c.l.b16 %v270
        %v550 = vunpack.c.l.b16 %v271
        %v551 = vunpack.c.l.b16 %v272
        %v552 = vunpack.c.l.b16 %v273
        %v553 = vunpack.c.l.b16 %v274
        %v554 = vunpack.c.l.b16 %v275
        %v555 = vunpack.c.l.b16 %v276
        %v556 = vunpack.c.l.b16 %v277
        %v557 = vunpack.c.l.b16 %v278
        %v558 = vunpack.c.l.b16 %v279
        %v559 = vunpack.c.l.b16 %v280
        %v560 = vunpack.c.l.b16 %v281
        %v561 = vunpack.c.l.b16 %v282
        %v562 = vunpack.c.l.b16 %v283
        %v563 = vunpack.c.l.b16 %v284
        %v564 = vunpack.c.l.b16 %v285
        %v565 = vunpack.c.l.b16 %v286
        %v566 = vunpack.c.l.b16 %v287
        %v567 = vunpack.c.l.b16 %v288
        %v568 = vunpack.c.l.b16 %v289
        %v569 = vunpack.c.l.b16 %v290
        %v570 = vunpack.c.l.b16 %v291
        %v571 = vunpack.c.l.b16 %v292
        %v572 = vunpack.c.l.b16 %v293
        %v573 = vunpack.c.l.b16 %v294
        %v574 = vunpack.c.l.b16 %v295
        %v575 = vunpack.c.l.b16 %v296
        %v576 = vunpack.c.l.b16 %v297
        %v577 = vunpack.c.l.b16 %v298
        %v578 = vunpack.c.l.b16 %v299
        %v579 = vunpack.c.l.b16 %v300
        %v580 = vunpack.c.l.b16 %v301
        %v581 = vunpack.c.l.b16 %v302
        %v582 = vunpack.c.l.b16 %v303
        %v583 = vunpack.c.l.b16 %v304
        %v584 = vunpack.c.l.b16 %v305
        %v585 = vunpack.c.l.b16 %v306
        %v586 = vunpack.c.l.b16 %v307
        %v587 = vunpack.c.l.b16 %v308
        %v588 = vunpack.c.l.b16 %v309
        %v589 = vunpack.c.l.b16 %v310
        %v590 = vunpack.c.l.b16 %v311
        %v591 = vunpack.c.l.b16 %v312
        %v592 = vunpack.c.l.b16 %v313
        %v593 = vunpack.c.l.b16 %v314
        %v594 = vunpack.c.l.b16 %v315
        %v595 = vunpack.c.l.b16 %v316
        %v596 = vunpack.c.l.b16 %v317
        %v597 = vunpack.c.l.b16 %v318
        %v598 = vunpack.c.l.b16 %v319
        %v599 = vunpack.c.l.b16 %v320
        %v600 = vunpack.c.l.b16 %v321
        %v601 = vunpack.c.l.b16 %v322
        %v602 = vunpack.c.l.b16 %v323
        %v603 = vunpack.c.l.b16 %v324
        %v604 = vunpack.c.l.b16 %v325
        %v605 = vunpack.c.l.b16 %v326
        %v606 = vunpack.c.l.b16 %v327
        %v607 = vunpack.c.l.b16 %v328
        %v608 = vunpack.c.l.b16 %v329
        %v609 = vunpack.c.l.b16 %v330
        %v610 = vunpack.c.l.b16 %v331
        %v611 = vunpack.c.l.b16 %v332
        %v612 = vpack.c.b16 %v485, %v484
        %v613 = vpack.c.b16 %v487, %v486
        %v614 = vpack.c.b16 %v489, %v488
        %v615 = vpack.c.b16 %v491, %v490
        %v616 = vpack.c.b16 %v493, %v492
        %v617 = vpack.c.b16 %v495, %v494
        %v618 = vpack.c.b16 %v497, %v496
        %v619 = vpack.c.b16 %v499, %v498
        %v620 = vpack.c.b16 %v501, %v500
        %v621 = vpack.c.b16 %v503, %v502
        %v622 = vpack.c.b16 %v505, %v504
        %v623 = vpack.c.b16 %v507, %v506
        %v624 = vpack.c.b16 %v509, %v508
        %v625 = vpack.c.b16 %v511, %v510
        %v626 = vpack.c.b16 %v513, %v512
        %v627 = vpack.c.b16 %v515, %v514
        %v628 = vpack.c.b16 %v517, %v516
        %v629 = vpack.c.b16 %v519, %v518
        %v630 = vpack.c.b16 %v521, %v520
        %v631 = vpack.c.b16 %v523, %v522
        %v632 = vpack.c.b16 %v525, %v524
        %v633 = vpack.c.b16 %v527, %v526
        %v634 = vpack.c.b16 %v529, %v528
        %v635 = vpack.c.b16 %v531, %v530
        %v636 = vpack.c.b16 %v533, %v532
        %v637 = vpack.c.b16 %v535, %v534
        %v638 = vpack.c.b16 %v537, %v536
        %v639 = vpack.c.b16 %v539, %v538
        %v640 = vpack.c.b16 %v541, %v540
        %v641 = vpack.c.b16 %v543, %v542
        %v642 = vpack.c.b16 %v545, %v544
        %v643 = vpack.c.b16 %v547, %v546
        %v644 = vpack.c.b16 %v549, %v548
        %v645 = vpack.c.b16 %v551, %v550
        %v646 = vpack.c.b16 %v553, %v552
        %v647 = vpack.c.b16 %v555, %v554
        %v648 = vpack.c.b16 %v557, %v556
        %v649 = vpack.c.b16 %v559, %v558
        %v650 = vpack.c.b16 %v561, %v560
        %v651 = vpack.c.b16 %v563, %v562
        %v652 = vpack.c.b16 %v565, %v564
        %v653 = vpack.c.b16 %v567, %v566
        %v654 = vpack.c.b16 %v569, %v568
        %v655 = vpack.c.b16 %v571, %v570
        %v656 = vpack.c.b16 %v573, %v572
        %v657 = vpack.c.b16 %v575, %v574
        %v658 = vpack.c.b16 %v577, %v576
        %v659 = vpack.c.b16 %v579, %v578
        %v660 = vpack.c.b16 %v581, %v580
        %v661 = vpack.c.b16 %v583, %v582
        %v662 = vpack.c.b16 %v585, %v584
        %v663 = vpack.c.b16 %v587, %v586
        %v664 = vpack.c.b16 %v589, %v588
        %v665 = vpack.c.b16 %v591, %v590
        %v666 = vpack.c.b16 %v593, %v592
        %v667 = vpack.c.b16 %v595, %v594
        %v668 = vpack.c.b16 %v597, %v596
        %v669 = vpack.c.b16 %v599, %v598
        %v670 = vpack.c.b16 %v601, %v600
        %v671 = vpack.c.b16 %v603, %v602
        %v672 = vpack.c.b16 %v605, %v604
        %v673 = vpack.c.b16 %v607, %v606
        %v674 = vpack.c.b16 %v609, %v608
        %v675 = vpack.c.b16 %v611, %v610
        %v756 = vunpack.c.l.b16 %v333
        %v757 = vunpack.c.l.b16 %v334
        %v758 = vunpack.c.l.b16 %v335
        %v759 = vunpack.c.l.b16 %v336
        %v760 = vunpack.c.l.b16 %v337
        %v761 = vunpack.c.l.b16 %v338
        %v762 = vunpack.c.l.b16 %v339
        %v763 = vunpack.c.l.b16 %v340
        %v764 = vunpack.c.l.b16 %v341
        %v765 = vunpack.c.l.b16 %v342
        %v766 = vunpack.c.l.b16 %v343
        %v767 = vunpack.c.l.b16 %v344
        %v768 = vunpack.c.l.b16 %v345
        %v769 = vunpack.c.l.b16 %v346
        %v770 = vunpack.c.l.b16 %v347
        %v771 = vunpack.c.l.b16 %v348
        %v772 = vpack.c.b16 %v757, %v756
        %v773 = vpack.c.b16 %v759, %v758
        %v774 = vpack.c.b16 %v761, %v760
        %v775 = vpack.c.b16 %v763, %v762
        %v776 = vpack.c.b16 %v765, %v764
        %v777 = vpack.c.b16 %v767, %v766
        %v778 = vpack.c.b16 %v769, %v768
        %v779 = vpack.c.b16 %v771, %v770
        %788 = vmatprep.subr.bf16.mxu0 0
        %789 = vmatpush1.bf16.msra.mxu0 %v779
        %790 = vmatprep.subr.bf16.mxu0 0
        %791 = vmatpush1.bf16.msra.mxu0 %v778
        %792 = vmatprep.subr.bf16.mxu0 0
        %793 = vmatpush1.bf16.msra.mxu0 %v777
        %794 = vmatprep.subr.bf16.mxu0 0
        %795 = vmatpush1.bf16.msra.mxu0 %v776
        %796 = vmatprep.subr.bf16.mxu0 0
        %797 = vmatpush1.bf16.msra.mxu0 %v775
        %798 = vmatprep.subr.bf16.mxu0 0
        %799 = vmatpush1.bf16.msra.mxu0 %v774
        %800 = vmatprep.subr.bf16.mxu0 0
        %801 = vmatpush1.bf16.msra.mxu0 %v773
        %802 = vmatprep.subr.bf16.mxu0 0
        %803 = vmatpush1.bf16.msra.mxu0 %v772
        %804 = vmatprep.subr.bf16.mxu0 0
        %805 = vmatpush2.bf16.msra.mxu0 0
        %806 = vmatprep.subr.bf16.mxu0 0
        %807 = vmatpush2.bf16.msra.mxu0 0
        %808 = vmatprep.subr.bf16.mxu0 0
        %809 = vmatpush2.bf16.msra.mxu0 0
        %810 = vmatprep.subr.bf16.mxu0 0
        %811 = vmatpush2.bf16.msra.mxu0 0
        %812 = vmatprep.subr.bf16.mxu0 0
        %813 = vmatpush2.bf16.msra.mxu0 0
        %814 = vmatprep.subr.bf16.mxu0 0
        %815 = vmatpush2.bf16.msra.mxu0 0
        %816 = vmatprep.subr.bf16.mxu0 0
        %817 = vmatpush2.bf16.msra.mxu0 0
        %818 = vmatprep.subr.bf16.mxu0 0
        %819 = vmatpush2.bf16.msra.mxu0 0
        %820 = vmatprep.mubr.bf16.mxu0 0
        %821 = vmatmul.mubr.bf16.gmra.mxu0 %v612
        %v822 = vpop.f32.mrf.mxu0
        %v823 = vadd.f32 %v354, %v822
        %v824 = vpop.f32.mrf.mxu0
        %v825 = vpop.f32.mrf.mxu0
        %v826 = vadd.f32 %v354, %v825
        %v827 = vpop.f32.mrf.mxu0
        %828 = vmatprep.mubr.bf16.mxu0 0
        %829 = vmatmul.mubr.bf16.gmra.mxu0 %v613
        %v830 = vpop.f32.mrf.mxu0
        %v831 = vadd.f32 %v354, %v830
        %v832 = vpop.f32.mrf.mxu0
        %v833 = vpop.f32.mrf.mxu0
        %v834 = vadd.f32 %v354, %v833
        %v835 = vpop.f32.mrf.mxu0
        %836 = vmatprep.mubr.bf16.mxu0 0
        %837 = vmatmul.mubr.bf16.gmra.mxu0 %v614
        %v838 = vpop.f32.mrf.mxu0
        %v839 = vadd.f32 %v354, %v838
        %v840 = vpop.f32.mrf.mxu0
        %v841 = vpop.f32.mrf.mxu0
        %v842 = vadd.f32 %v354, %v841
        %v843 = vpop.f32.mrf.mxu0
        %844 = vmatprep.mubr.bf16.mxu0 0
        %845 = vmatmul.mubr.bf16.gmra.mxu0 %v615
        %v846 = vpop.f32.mrf.mxu0
        %v847 = vadd.f32 %v354, %v846
        %v848 = vpop.f32.mrf.mxu0
        %v849 = vpop.f32.mrf.mxu0
        %v850 = vadd.f32 %v354, %v849
        %v851 = vpop.f32.mrf.mxu0
        %852 = vmatprep.mubr.bf16.mxu0 0
        %853 = vmatmul.mubr.bf16.gmra.mxu0 %v616
        %v854 = vpop.f32.mrf.mxu0
        %v855 = vadd.f32 %v354, %v854
        %v856 = vpop.f32.mrf.mxu0
        %v857 = vpop.f32.mrf.mxu0
        %v858 = vadd.f32 %v354, %v857
        %v859 = vpop.f32.mrf.mxu0
        %860 = vmatprep.mubr.bf16.mxu0 0
        %861 = vmatmul.mubr.bf16.gmra.mxu0 %v617
        %v862 = vpop.f32.mrf.mxu0
        %v863 = vadd.f32 %v354, %v862
        %v864 = vpop.f32.mrf.mxu0
        %v865 = vpop.f32.mrf.mxu0
        %v866 = vadd.f32 %v354, %v865
        %v867 = vpop.f32.mrf.mxu0
        %868 = vmatprep.mubr.bf16.mxu0 0
        %869 = vmatmul.mubr.bf16.gmra.mxu0 %v618
        %v870 = vpop.f32.mrf.mxu0
        %v871 = vadd.f32 %v354, %v870
        %v872 = vpop.f32.mrf.mxu0
        %v873 = vpop.f32.mrf.mxu0
        %v874 = vadd.f32 %v354, %v873
        %v875 = vpop.f32.mrf.mxu0
        %876 = vmatprep.mubr.bf16.mxu0 0
        %877 = vmatmul.mubr.bf16.gmra.mxu0 %v619
        %v878 = vpop.f32.mrf.mxu0
        %v879 = vadd.f32 %v354, %v878
        %v880 = vpop.f32.mrf.mxu0
        %v881 = vpop.f32.mrf.mxu0
        %v882 = vadd.f32 %v354, %v881
        %v883 = vpop.f32.mrf.mxu0
        %884 = vmatprep.mubr.bf16.mxu0 0
        %885 = vmatmul.mubr.bf16.gmra.mxu0 %v620
        %v886 = vpop.f32.mrf.mxu0
        %v887 = vadd.f32 %v354, %v886
        %v888 = vpop.f32.mrf.mxu0
        %v889 = vpop.f32.mrf.mxu0
        %v890 = vadd.f32 %v354, %v889
        %v891 = vpop.f32.mrf.mxu0
        %892 = vmatprep.mubr.bf16.mxu0 0
        %893 = vmatmul.mubr.bf16.gmra.mxu0 %v621
        %v894 = vpop.f32.mrf.mxu0
        %v895 = vadd.f32 %v354, %v894
        %v896 = vpop.f32.mrf.mxu0
        %v897 = vpop.f32.mrf.mxu0
        %v898 = vadd.f32 %v354, %v897
        %v899 = vpop.f32.mrf.mxu0
        %900 = vmatprep.mubr.bf16.mxu0 0
        %901 = vmatmul.mubr.bf16.gmra.mxu0 %v622
        %v902 = vpop.f32.mrf.mxu0
        %v903 = vadd.f32 %v354, %v902
        %v904 = vpop.f32.mrf.mxu0
        %v905 = vpop.f32.mrf.mxu0
        %v906 = vadd.f32 %v354, %v905
        %v907 = vpop.f32.mrf.mxu0
        %908 = vmatprep.mubr.bf16.mxu0 0
        %909 = vmatmul.mubr.bf16.gmra.mxu0 %v623
        %v910 = vpop.f32.mrf.mxu0
        %v911 = vadd.f32 %v354, %v910
        %v912 = vpop.f32.mrf.mxu0
        %v913 = vpop.f32.mrf.mxu0
        %v914 = vadd.f32 %v354, %v913
        %v915 = vpop.f32.mrf.mxu0
        %916 = vmatprep.mubr.bf16.mxu0 0
        %917 = vmatmul.mubr.bf16.gmra.mxu0 %v624
        %v918 = vpop.f32.mrf.mxu0
        %v919 = vadd.f32 %v354, %v918
        %v920 = vpop.f32.mrf.mxu0
        %v921 = vpop.f32.mrf.mxu0
        %v922 = vadd.f32 %v354, %v921
        %v923 = vpop.f32.mrf.mxu0
        %924 = vmatprep.mubr.bf16.mxu0 0
        %925 = vmatmul.mubr.bf16.gmra.mxu0 %v625
        %v926 = vpop.f32.mrf.mxu0
        %v927 = vadd.f32 %v354, %v926
        %v928 = vpop.f32.mrf.mxu0
        %v929 = vpop.f32.mrf.mxu0
        %v930 = vadd.f32 %v354, %v929
        %v931 = vpop.f32.mrf.mxu0
        %932 = vmatprep.mubr.bf16.mxu0 0
        %933 = vmatmul.mubr.bf16.gmra.mxu0 %v626
        %v934 = vpop.f32.mrf.mxu0
        %v935 = vadd.f32 %v354, %v934
        %v936 = vpop.f32.mrf.mxu0
        %v937 = vpop.f32.mrf.mxu0
        %v938 = vadd.f32 %v354, %v937
        %v939 = vpop.f32.mrf.mxu0
        %940 = vmatprep.mubr.bf16.mxu0 0
        %941 = vmatmul.mubr.bf16.gmra.mxu0 %v627
        %v942 = vpop.f32.mrf.mxu0
        %v943 = vadd.f32 %v354, %v942
        %v944 = vpop.f32.mrf.mxu0
        %v945 = vpop.f32.mrf.mxu0
        %v946 = vadd.f32 %v354, %v945
        %v947 = vpop.f32.mrf.mxu0
        %948 = vmatprep.mubr.bf16.mxu0 0
        %949 = vmatmul.mubr.bf16.gmra.mxu0 %v628
        %v950 = vpop.f32.mrf.mxu0
        %v951 = vadd.f32 %v354, %v950
        %v952 = vpop.f32.mrf.mxu0
        %v953 = vpop.f32.mrf.mxu0
        %v954 = vadd.f32 %v354, %v953
        %v955 = vpop.f32.mrf.mxu0
        %956 = vmatprep.mubr.bf16.mxu0 0
        %957 = vmatmul.mubr.bf16.gmra.mxu0 %v629
        %v958 = vpop.f32.mrf.mxu0
        %v959 = vadd.f32 %v354, %v958
        %v960 = vpop.f32.mrf.mxu0
        %v961 = vpop.f32.mrf.mxu0
        %v962 = vadd.f32 %v354, %v961
        %v963 = vpop.f32.mrf.mxu0
        %964 = vmatprep.mubr.bf16.mxu0 0
        %965 = vmatmul.mubr.bf16.gmra.mxu0 %v630
        %v966 = vpop.f32.mrf.mxu0
        %v967 = vadd.f32 %v354, %v966
        %v968 = vpop.f32.mrf.mxu0
        %v969 = vpop.f32.mrf.mxu0
        %v970 = vadd.f32 %v354, %v969
        %v971 = vpop.f32.mrf.mxu0
        %972 = vmatprep.mubr.bf16.mxu0 0
        %973 = vmatmul.mubr.bf16.gmra.mxu0 %v631
        %v974 = vpop.f32.mrf.mxu0
        %v975 = vadd.f32 %v354, %v974
        %v976 = vpop.f32.mrf.mxu0
        %v977 = vpop.f32.mrf.mxu0
        %v978 = vadd.f32 %v354, %v977
        %v979 = vpop.f32.mrf.mxu0
        %980 = vmatprep.mubr.bf16.mxu0 0
        %981 = vmatmul.mubr.bf16.gmra.mxu0 %v632
        %v982 = vpop.f32.mrf.mxu0
        %v983 = vadd.f32 %v354, %v982
        %v984 = vpop.f32.mrf.mxu0
        %v985 = vpop.f32.mrf.mxu0
        %v986 = vadd.f32 %v354, %v985
        %v987 = vpop.f32.mrf.mxu0
        %988 = vmatprep.mubr.bf16.mxu0 0
        %989 = vmatmul.mubr.bf16.gmra.mxu0 %v633
        %v990 = vpop.f32.mrf.mxu0
        %v991 = vadd.f32 %v354, %v990
        %v992 = vpop.f32.mrf.mxu0
        %v993 = vpop.f32.mrf.mxu0
        %v994 = vadd.f32 %v354, %v993
        %v995 = vpop.f32.mrf.mxu0
        %996 = vmatprep.mubr.bf16.mxu0 0
        %997 = vmatmul.mubr.bf16.gmra.mxu0 %v634
        %v998 = vpop.f32.mrf.mxu0
        %v999 = vadd.f32 %v354, %v998
        %v1000 = vpop.f32.mrf.mxu0
        %v1001 = vpop.f32.mrf.mxu0
        %v1002 = vadd.f32 %v354, %v1001
        %v1003 = vpop.f32.mrf.mxu0
        %1004 = vmatprep.mubr.bf16.mxu0 0
        %1005 = vmatmul.mubr.bf16.gmra.mxu0 %v635
        %v1006 = vpop.f32.mrf.mxu0
        %v1007 = vadd.f32 %v354, %v1006
        %v1008 = vpop.f32.mrf.mxu0
        %v1009 = vpop.f32.mrf.mxu0
        %v1010 = vadd.f32 %v354, %v1009
        %v1011 = vpop.f32.mrf.mxu0
        %1012 = vmatprep.mubr.bf16.mxu0 0
        %1013 = vmatmul.mubr.bf16.gmra.mxu0 %v636
        %v1014 = vpop.f32.mrf.mxu0
        %v1015 = vadd.f32 %v354, %v1014
        %v1016 = vpop.f32.mrf.mxu0
        %v1017 = vpop.f32.mrf.mxu0
        %v1018 = vadd.f32 %v354, %v1017
        %v1019 = vpop.f32.mrf.mxu0
        %1020 = vmatprep.mubr.bf16.mxu0 0
        %1021 = vmatmul.mubr.bf16.gmra.mxu0 %v637
        %v1022 = vpop.f32.mrf.mxu0
        %v1023 = vadd.f32 %v354, %v1022
        %v1024 = vpop.f32.mrf.mxu0
        %v1025 = vpop.f32.mrf.mxu0
        %v1026 = vadd.f32 %v354, %v1025
        %v1027 = vpop.f32.mrf.mxu0
        %1028 = vmatprep.mubr.bf16.mxu0 0
        %1029 = vmatmul.mubr.bf16.gmra.mxu0 %v638
        %v1030 = vpop.f32.mrf.mxu0
        %v1031 = vadd.f32 %v354, %v1030
        %v1032 = vpop.f32.mrf.mxu0
        %v1033 = vpop.f32.mrf.mxu0
        %v1034 = vadd.f32 %v354, %v1033
        %v1035 = vpop.f32.mrf.mxu0
        %1036 = vmatprep.mubr.bf16.mxu0 0
        %1037 = vmatmul.mubr.bf16.gmra.mxu0 %v639
        %v1038 = vpop.f32.mrf.mxu0
        %v1039 = vadd.f32 %v354, %v1038
        %v1040 = vpop.f32.mrf.mxu0
        %v1041 = vpop.f32.mrf.mxu0
        %v1042 = vadd.f32 %v354, %v1041
        %v1043 = vpop.f32.mrf.mxu0
        %1044 = vmatprep.mubr.bf16.mxu0 0
        %1045 = vmatmul.mubr.bf16.gmra.mxu0 %v640
        %v1046 = vpop.f32.mrf.mxu0
        %v1047 = vadd.f32 %v354, %v1046
        %v1048 = vpop.f32.mrf.mxu0
        %v1049 = vpop.f32.mrf.mxu0
        %v1050 = vadd.f32 %v354, %v1049
        %v1051 = vpop.f32.mrf.mxu0
        %1052 = vmatprep.mubr.bf16.mxu0 0
        %1053 = vmatmul.mubr.bf16.gmra.mxu0 %v641
        %v1054 = vpop.f32.mrf.mxu0
        %v1055 = vadd.f32 %v354, %v1054
        %v1056 = vpop.f32.mrf.mxu0
        %v1057 = vpop.f32.mrf.mxu0
        %v1058 = vadd.f32 %v354, %v1057
        %v1059 = vpop.f32.mrf.mxu0
        %1060 = vmatprep.mubr.bf16.mxu0 0
        %1061 = vmatmul.mubr.bf16.gmra.mxu0 %v642
        %v1062 = vpop.f32.mrf.mxu0
        %v1063 = vadd.f32 %v354, %v1062
        %v1064 = vpop.f32.mrf.mxu0
        %v1065 = vpop.f32.mrf.mxu0
        %v1066 = vadd.f32 %v354, %v1065
        %v1067 = vpop.f32.mrf.mxu0
        %1068 = vmatprep.mubr.bf16.mxu0 0
        %1069 = vmatmul.mubr.bf16.gmra.mxu0 %v643
        %v1070 = vpop.f32.mrf.mxu0
        %v1071 = vadd.f32 %v354, %v1070
        %v1072 = vpop.f32.mrf.mxu0
        %v1073 = vpop.f32.mrf.mxu0
        %v1074 = vadd.f32 %v354, %v1073
        %v1075 = vpop.f32.mrf.mxu0
        %1076 = vmatprep.mubr.bf16.mxu0 0
        %1077 = vmatmul.mubr.bf16.gmra.mxu0 %v644
        %v1078 = vpop.f32.mrf.mxu0
        %v1079 = vadd.f32 %v354, %v1078
        %v1080 = vpop.f32.mrf.mxu0
        %v1081 = vpop.f32.mrf.mxu0
        %v1082 = vadd.f32 %v354, %v1081
        %v1083 = vpop.f32.mrf.mxu0
        %1084 = vmatprep.mubr.bf16.mxu0 0
        %1085 = vmatmul.mubr.bf16.gmra.mxu0 %v645
        %v1086 = vpop.f32.mrf.mxu0
        %v1087 = vadd.f32 %v354, %v1086
        %v1088 = vpop.f32.mrf.mxu0
        %v1089 = vpop.f32.mrf.mxu0
        %v1090 = vadd.f32 %v354, %v1089
        %v1091 = vpop.f32.mrf.mxu0
        %1092 = vmatprep.mubr.bf16.mxu0 0
        %1093 = vmatmul.mubr.bf16.gmra.mxu0 %v646
        %v1094 = vpop.f32.mrf.mxu0
        %v1095 = vadd.f32 %v354, %v1094
        %v1096 = vpop.f32.mrf.mxu0
        %v1097 = vpop.f32.mrf.mxu0
        %v1098 = vadd.f32 %v354, %v1097
        %v1099 = vpop.f32.mrf.mxu0
        %1100 = vmatprep.mubr.bf16.mxu0 0
        %1101 = vmatmul.mubr.bf16.gmra.mxu0 %v647
        %v1102 = vpop.f32.mrf.mxu0
        %v1103 = vadd.f32 %v354, %v1102
        %v1104 = vpop.f32.mrf.mxu0
        %v1105 = vpop.f32.mrf.mxu0
        %v1106 = vadd.f32 %v354, %v1105
        %v1107 = vpop.f32.mrf.mxu0
        %1108 = vmatprep.mubr.bf16.mxu0 0
        %1109 = vmatmul.mubr.bf16.gmra.mxu0 %v648
        %v1110 = vpop.f32.mrf.mxu0
        %v1111 = vadd.f32 %v354, %v1110
        %v1112 = vpop.f32.mrf.mxu0
        %v1113 = vpop.f32.mrf.mxu0
        %v1114 = vadd.f32 %v354, %v1113
        %v1115 = vpop.f32.mrf.mxu0
        %1116 = vmatprep.mubr.bf16.mxu0 0
        %1117 = vmatmul.mubr.bf16.gmra.mxu0 %v649
        %v1118 = vpop.f32.mrf.mxu0
        %v1119 = vadd.f32 %v354, %v1118
        %v1120 = vpop.f32.mrf.mxu0
        %v1121 = vpop.f32.mrf.mxu0
        %v1122 = vadd.f32 %v354, %v1121
        %v1123 = vpop.f32.mrf.mxu0
        %1124 = vmatprep.mubr.bf16.mxu0 0
        %1125 = vmatmul.mubr.bf16.gmra.mxu0 %v650
        %v1126 = vpop.f32.mrf.mxu0
        %v1127 = vadd.f32 %v354, %v1126
        %v1128 = vpop.f32.mrf.mxu0
        %v1129 = vpop.f32.mrf.mxu0
        %v1130 = vadd.f32 %v354, %v1129
        %v1131 = vpop.f32.mrf.mxu0
        %1132 = vmatprep.mubr.bf16.mxu0 0
        %1133 = vmatmul.mubr.bf16.gmra.mxu0 %v651
        %v1134 = vpop.f32.mrf.mxu0
        %v1135 = vadd.f32 %v354, %v1134
        %v1136 = vpop.f32.mrf.mxu0
        %v1137 = vpop.f32.mrf.mxu0
        %v1138 = vadd.f32 %v354, %v1137
        %v1139 = vpop.f32.mrf.mxu0
        %1140 = vmatprep.mubr.bf16.mxu0 0
        %1141 = vmatmul.mubr.bf16.gmra.mxu0 %v652
        %v1142 = vpop.f32.mrf.mxu0
        %v1143 = vadd.f32 %v354, %v1142
        %v1144 = vpop.f32.mrf.mxu0
        %v1145 = vpop.f32.mrf.mxu0
        %v1146 = vadd.f32 %v354, %v1145
        %v1147 = vpop.f32.mrf.mxu0
        %1148 = vmatprep.mubr.bf16.mxu0 0
        %1149 = vmatmul.mubr.bf16.gmra.mxu0 %v653
        %v1150 = vpop.f32.mrf.mxu0
        %v1151 = vadd.f32 %v354, %v1150
        %v1152 = vpop.f32.mrf.mxu0
        %v1153 = vpop.f32.mrf.mxu0
        %v1154 = vadd.f32 %v354, %v1153
        %v1155 = vpop.f32.mrf.mxu0
        %1156 = vmatprep.mubr.bf16.mxu0 0
        %1157 = vmatmul.mubr.bf16.gmra.mxu0 %v654
        %v1158 = vpop.f32.mrf.mxu0
        %v1159 = vadd.f32 %v354, %v1158
        %v1160 = vpop.f32.mrf.mxu0
        %v1161 = vpop.f32.mrf.mxu0
        %v1162 = vadd.f32 %v354, %v1161
        %v1163 = vpop.f32.mrf.mxu0
        %1164 = vmatprep.mubr.bf16.mxu0 0
        %1165 = vmatmul.mubr.bf16.gmra.mxu0 %v655
        %v1166 = vpop.f32.mrf.mxu0
        %v1167 = vadd.f32 %v354, %v1166
        %v1168 = vpop.f32.mrf.mxu0
        %v1169 = vpop.f32.mrf.mxu0
        %v1170 = vadd.f32 %v354, %v1169
        %v1171 = vpop.f32.mrf.mxu0
        %1172 = vmatprep.mubr.bf16.mxu0 0
        %1173 = vmatmul.mubr.bf16.gmra.mxu0 %v656
        %v1174 = vpop.f32.mrf.mxu0
        %v1175 = vadd.f32 %v354, %v1174
        %v1176 = vpop.f32.mrf.mxu0
        %v1177 = vpop.f32.mrf.mxu0
        %v1178 = vadd.f32 %v354, %v1177
        %v1179 = vpop.f32.mrf.mxu0
        %1180 = vmatprep.mubr.bf16.mxu0 0
        %1181 = vmatmul.mubr.bf16.gmra.mxu0 %v657
        %v1182 = vpop.f32.mrf.mxu0
        %v1183 = vadd.f32 %v354, %v1182
        %v1184 = vpop.f32.mrf.mxu0
        %v1185 = vpop.f32.mrf.mxu0
        %v1186 = vadd.f32 %v354, %v1185
        %v1187 = vpop.f32.mrf.mxu0
        %1188 = vmatprep.mubr.bf16.mxu0 0
        %1189 = vmatmul.mubr.bf16.gmra.mxu0 %v658
        %v1190 = vpop.f32.mrf.mxu0
        %v1191 = vadd.f32 %v354, %v1190
        %v1192 = vpop.f32.mrf.mxu0
        %v1193 = vpop.f32.mrf.mxu0
        %v1194 = vadd.f32 %v354, %v1193
        %v1195 = vpop.f32.mrf.mxu0
        %1196 = vmatprep.mubr.bf16.mxu0 0
        %1197 = vmatmul.mubr.bf16.gmra.mxu0 %v659
        %v1198 = vpop.f32.mrf.mxu0
        %v1199 = vadd.f32 %v354, %v1198
        %v1200 = vpop.f32.mrf.mxu0
        %v1201 = vpop.f32.mrf.mxu0
        %v1202 = vadd.f32 %v354, %v1201
        %v1203 = vpop.f32.mrf.mxu0
        %1204 = vmatprep.mubr.bf16.mxu0 0
        %1205 = vmatmul.mubr.bf16.gmra.mxu0 %v660
        %v1206 = vpop.f32.mrf.mxu0
        %v1207 = vadd.f32 %v354, %v1206
        %v1208 = vpop.f32.mrf.mxu0
        %v1209 = vpop.f32.mrf.mxu0
        %v1210 = vadd.f32 %v354, %v1209
        %v1211 = vpop.f32.mrf.mxu0
        %1212 = vmatprep.mubr.bf16.mxu0 0
        %1213 = vmatmul.mubr.bf16.gmra.mxu0 %v661
        %v1214 = vpop.f32.mrf.mxu0
        %v1215 = vadd.f32 %v354, %v1214
        %v1216 = vpop.f32.mrf.mxu0
        %v1217 = vpop.f32.mrf.mxu0
        %v1218 = vadd.f32 %v354, %v1217
        %v1219 = vpop.f32.mrf.mxu0
        %1220 = vmatprep.mubr.bf16.mxu0 0
        %1221 = vmatmul.mubr.bf16.gmra.mxu0 %v662
        %v1222 = vpop.f32.mrf.mxu0
        %v1223 = vadd.f32 %v354, %v1222
        %v1224 = vpop.f32.mrf.mxu0
        %v1225 = vpop.f32.mrf.mxu0
        %v1226 = vadd.f32 %v354, %v1225
        %v1227 = vpop.f32.mrf.mxu0
        %1228 = vmatprep.mubr.bf16.mxu0 0
        %1229 = vmatmul.mubr.bf16.gmra.mxu0 %v663
        %v1230 = vpop.f32.mrf.mxu0
        %v1231 = vadd.f32 %v354, %v1230
        %v1232 = vpop.f32.mrf.mxu0
        %v1233 = vpop.f32.mrf.mxu0
        %v1234 = vadd.f32 %v354, %v1233
        %v1235 = vpop.f32.mrf.mxu0
        %1236 = vmatprep.mubr.bf16.mxu0 0
        %1237 = vmatmul.mubr.bf16.gmra.mxu0 %v664
        %v1238 = vpop.f32.mrf.mxu0
        %v1239 = vadd.f32 %v354, %v1238
        %v1240 = vpop.f32.mrf.mxu0
        %v1241 = vpop.f32.mrf.mxu0
        %v1242 = vadd.f32 %v354, %v1241
        %v1243 = vpop.f32.mrf.mxu0
        %1244 = vmatprep.mubr.bf16.mxu0 0
        %1245 = vmatmul.mubr.bf16.gmra.mxu0 %v665
        %v1246 = vpop.f32.mrf.mxu0
        %v1247 = vadd.f32 %v354, %v1246
        %v1248 = vpop.f32.mrf.mxu0
        %v1249 = vpop.f32.mrf.mxu0
        %v1250 = vadd.f32 %v354, %v1249
        %v1251 = vpop.f32.mrf.mxu0
        %1252 = vmatprep.mubr.bf16.mxu0 0
        %1253 = vmatmul.mubr.bf16.gmra.mxu0 %v666
        %v1254 = vpop.f32.mrf.mxu0
        %v1255 = vadd.f32 %v354, %v1254
        %v1256 = vpop.f32.mrf.mxu0
        %v1257 = vpop.f32.mrf.mxu0
        %v1258 = vadd.f32 %v354, %v1257
        %v1259 = vpop.f32.mrf.mxu0
        %1260 = vmatprep.mubr.bf16.mxu0 0
        %1261 = vmatmul.mubr.bf16.gmra.mxu0 %v667
        %v1262 = vpop.f32.mrf.mxu0
        %v1263 = vadd.f32 %v354, %v1262
        %v1264 = vpop.f32.mrf.mxu0
        %v1265 = vpop.f32.mrf.mxu0
        %v1266 = vadd.f32 %v354, %v1265
        %v1267 = vpop.f32.mrf.mxu0
        %1268 = vmatprep.mubr.bf16.mxu0 0
        %1269 = vmatmul.mubr.bf16.gmra.mxu0 %v668
        %v1270 = vpop.f32.mrf.mxu0
        %v1271 = vadd.f32 %v354, %v1270
        %v1272 = vpop.f32.mrf.mxu0
        %v1273 = vpop.f32.mrf.mxu0
        %v1274 = vadd.f32 %v354, %v1273
        %v1275 = vpop.f32.mrf.mxu0
        %1276 = vmatprep.mubr.bf16.mxu0 0
        %1277 = vmatmul.mubr.bf16.gmra.mxu0 %v669
        %v1278 = vpop.f32.mrf.mxu0
        %v1279 = vadd.f32 %v354, %v1278
        %v1280 = vpop.f32.mrf.mxu0
        %v1281 = vpop.f32.mrf.mxu0
        %v1282 = vadd.f32 %v354, %v1281
        %v1283 = vpop.f32.mrf.mxu0
        %1284 = vmatprep.mubr.bf16.mxu0 0
        %1285 = vmatmul.mubr.bf16.gmra.mxu0 %v670
        %v1286 = vpop.f32.mrf.mxu0
        %v1287 = vadd.f32 %v354, %v1286
        %v1288 = vpop.f32.mrf.mxu0
        %v1289 = vpop.f32.mrf.mxu0
        %v1290 = vadd.f32 %v354, %v1289
        %v1291 = vpop.f32.mrf.mxu0
        %1292 = vmatprep.mubr.bf16.mxu0 0
        %1293 = vmatmul.mubr.bf16.gmra.mxu0 %v671
        %v1294 = vpop.f32.mrf.mxu0
        %v1295 = vadd.f32 %v354, %v1294
        %v1296 = vpop.f32.mrf.mxu0
        %v1297 = vpop.f32.mrf.mxu0
        %v1298 = vadd.f32 %v354, %v1297
        %v1299 = vpop.f32.mrf.mxu0
        %1300 = vmatprep.mubr.bf16.mxu0 0
        %1301 = vmatmul.mubr.bf16.gmra.mxu0 %v672
        %v1302 = vpop.f32.mrf.mxu0
        %v1303 = vadd.f32 %v354, %v1302
        %v1304 = vpop.f32.mrf.mxu0
        %v1305 = vpop.f32.mrf.mxu0
        %v1306 = vadd.f32 %v354, %v1305
        %v1307 = vpop.f32.mrf.mxu0
        %1308 = vmatprep.mubr.bf16.mxu0 0
        %1309 = vmatmul.mubr.bf16.gmra.mxu0 %v673
        %v1310 = vpop.f32.mrf.mxu0
        %v1311 = vadd.f32 %v354, %v1310
        %v1312 = vpop.f32.mrf.mxu0
        %v1313 = vpop.f32.mrf.mxu0
        %v1314 = vadd.f32 %v354, %v1313
        %v1315 = vpop.f32.mrf.mxu0
        %1316 = vmatprep.mubr.bf16.mxu0 0
        %1317 = vmatmul.mubr.bf16.gmra.mxu0 %v674
        %v1318 = vpop.f32.mrf.mxu0
        %v1319 = vadd.f32 %v354, %v1318
        %v1320 = vpop.f32.mrf.mxu0
        %v1321 = vpop.f32.mrf.mxu0
        %v1322 = vadd.f32 %v354, %v1321
        %v1323 = vpop.f32.mrf.mxu0
        %1324 = vmatprep.mubr.bf16.mxu0 0
        %1325 = vmatmul.mubr.bf16.gmra.mxu0 %v675
        %v1326 = vpop.f32.mrf.mxu0
        %v1327 = vadd.f32 %v354, %v1326
        %v1328 = vpop.f32.mrf.mxu0
        %v1329 = vpop.f32.mrf.mxu0
        %v1330 = vadd.f32 %v354, %v1329
        %v1331 = vpop.f32.mrf.mxu0
        %1332 = vdwg.mxu0
        %v1333 = vmax.f32 %v823, 0.0
        %v1334 = vmax.f32 %v826, 0.0
        %v1335 = vmax.f32 %v831, 0.0
        %v1336 = vmax.f32 %v834, 0.0
        %v1337 = vmax.f32 %v839, 0.0
        %v1338 = vmax.f32 %v842, 0.0
        %v1339 = vmax.f32 %v847, 0.0
        %v1340 = vmax.f32 %v850, 0.0
        %v1341 = vmax.f32 %v855, 0.0
        %v1342 = vmax.f32 %v858, 0.0
        %v1343 = vmax.f32 %v863, 0.0
        %v1344 = vmax.f32 %v866, 0.0
        %v1345 = vmax.f32 %v871, 0.0
        %v1346 = vmax.f32 %v874, 0.0
        %v1347 = vmax.f32 %v879, 0.0
        %v1348 = vmax.f32 %v882, 0.0
        %v1349 = vmax.f32 %v887, 0.0
        %v1350 = vmax.f32 %v890, 0.0
        %v1351 = vmax.f32 %v895, 0.0
        %v1352 = vmax.f32 %v898, 0.0
        %v1353 = vmax.f32 %v903, 0.0
        %v1354 = vmax.f32 %v906, 0.0
        %v1355 = vmax.f32 %v911, 0.0
        %v1356 = vmax.f32 %v914, 0.0
        %v1357 = vmax.f32 %v919, 0.0
        %v1358 = vmax.f32 %v922, 0.0
        %v1359 = vmax.f32 %v927, 0.0
        %v1360 = vmax.f32 %v930, 0.0
        %v1361 = vmax.f32 %v935, 0.0
        %v1362 = vmax.f32 %v938, 0.0
        %v1363 = vmax.f32 %v943, 0.0
        %v1364 = vmax.f32 %v946, 0.0
        %v1365 = vmax.f32 %v951, 0.0
        %v1366 = vmax.f32 %v954, 0.0
        %v1367 = vmax.f32 %v959, 0.0
        %v1368 = vmax.f32 %v962, 0.0
        %v1369 = vmax.f32 %v967, 0.0
        %v1370 = vmax.f32 %v970, 0.0
        %v1371 = vmax.f32 %v975, 0.0
        %v1372 = vmax.f32 %v978, 0.0
        %v1373 = vmax.f32 %v983, 0.0
        %v1374 = vmax.f32 %v986, 0.0
        %v1375 = vmax.f32 %v991, 0.0
        %v1376 = vmax.f32 %v994, 0.0
        %v1377 = vmax.f32 %v999, 0.0
        %v1378 = vmax.f32 %v1002, 0.0
        %v1379 = vmax.f32 %v1007, 0.0
        %v1380 = vmax.f32 %v1010, 0.0
        %v1381 = vmax.f32 %v1015, 0.0
        %v1382 = vmax.f32 %v1018, 0.0
        %v1383 = vmax.f32 %v1023, 0.0
        %v1384 = vmax.f32 %v1026, 0.0
        %v1385 = vmax.f32 %v1031, 0.0
        %v1386 = vmax.f32 %v1034, 0.0
        %v1387 = vmax.f32 %v1039, 0.0
        %v1388 = vmax.f32 %v1042, 0.0
        %v1389 = vmax.f32 %v1047, 0.0
        %v1390 = vmax.f32 %v1050, 0.0
        %v1391 = vmax.f32 %v1055, 0.0
        %v1392 = vmax.f32 %v1058, 0.0
        %v1393 = vmax.f32 %v1063, 0.0
        %v1394 = vmax.f32 %v1066, 0.0
        %v1395 = vmax.f32 %v1071, 0.0
        %v1396 = vmax.f32 %v1074, 0.0
        %v1397 = vmax.f32 %v1079, 0.0
        %v1398 = vmax.f32 %v1082, 0.0
        %v1399 = vmax.f32 %v1087, 0.0
        %v1400 = vmax.f32 %v1090, 0.0
        %v1401 = vmax.f32 %v1095, 0.0
        %v1402 = vmax.f32 %v1098, 0.0
        %v1403 = vmax.f32 %v1103, 0.0
        %v1404 = vmax.f32 %v1106, 0.0
        %v1405 = vmax.f32 %v1111, 0.0
        %v1406 = vmax.f32 %v1114, 0.0
        %v1407 = vmax.f32 %v1119, 0.0
        %v1408 = vmax.f32 %v1122, 0.0
        %v1409 = vmax.f32 %v1127, 0.0
        %v1410 = vmax.f32 %v1130, 0.0
        %v1411 = vmax.f32 %v1135, 0.0
        %v1412 = vmax.f32 %v1138, 0.0
        %v1413 = vmax.f32 %v1143, 0.0
        %v1414 = vmax.f32 %v1146, 0.0
        %v1415 = vmax.f32 %v1151, 0.0
        %v1416 = vmax.f32 %v1154, 0.0
        %v1417 = vmax.f32 %v1159, 0.0
        %v1418 = vmax.f32 %v1162, 0.0
        %v1419 = vmax.f32 %v1167, 0.0
        %v1420 = vmax.f32 %v1170, 0.0
        %v1421 = vmax.f32 %v1175, 0.0
        %v1422 = vmax.f32 %v1178, 0.0
        %v1423 = vmax.f32 %v1183, 0.0
        %v1424 = vmax.f32 %v1186, 0.0
        %v1425 = vmax.f32 %v1191, 0.0
        %v1426 = vmax.f32 %v1194, 0.0
        %v1427 = vmax.f32 %v1199, 0.0
        %v1428 = vmax.f32 %v1202, 0.0
        %v1429 = vmax.f32 %v1207, 0.0
        %v1430 = vmax.f32 %v1210, 0.0
        %v1431 = vmax.f32 %v1215, 0.0
        %v1432 = vmax.f32 %v1218, 0.0
        %v1433 = vmax.f32 %v1223, 0.0
        %v1434 = vmax.f32 %v1226, 0.0
        %v1435 = vmax.f32 %v1231, 0.0
        %v1436 = vmax.f32 %v1234, 0.0
        %v1437 = vmax.f32 %v1239, 0.0
        %v1438 = vmax.f32 %v1242, 0.0
        %v1439 = vmax.f32 %v1247, 0.0
        %v1440 = vmax.f32 %v1250, 0.0
        %v1441 = vmax.f32 %v1255, 0.0
        %v1442 = vmax.f32 %v1258, 0.0
        %v1443 = vmax.f32 %v1263, 0.0
        %v1444 = vmax.f32 %v1266, 0.0
        %v1445 = vmax.f32 %v1271, 0.0
        %v1446 = vmax.f32 %v1274, 0.0
        %v1447 = vmax.f32 %v1279, 0.0
        %v1448 = vmax.f32 %v1282, 0.0
        %v1449 = vmax.f32 %v1287, 0.0
        %v1450 = vmax.f32 %v1290, 0.0
        %v1451 = vmax.f32 %v1295, 0.0
        %v1452 = vmax.f32 %v1298, 0.0
        %v1453 = vmax.f32 %v1303, 0.0
        %v1454 = vmax.f32 %v1306, 0.0
        %v1455 = vmax.f32 %v1311, 0.0
        %v1456 = vmax.f32 %v1314, 0.0
        %v1457 = vmax.f32 %v1319, 0.0
        %v1458 = vmax.f32 %v1322, 0.0
        %v1459 = vmax.f32 %v1327, 0.0
        %v1460 = vmax.f32 %v1330, 0.0
        %v1461 = vmin.f32 %v1333, 1.0
        %v1462 = vmin.f32 %v1334, 1.0
        %v1463 = vmin.f32 %v1335, 1.0
        %v1464 = vmin.f32 %v1336, 1.0
        %v1465 = vmin.f32 %v1337, 1.0
        %v1466 = vmin.f32 %v1338, 1.0
        %v1467 = vmin.f32 %v1339, 1.0
        %v1468 = vmin.f32 %v1340, 1.0
        %v1469 = vmin.f32 %v1341, 1.0
        %v1470 = vmin.f32 %v1342, 1.0
        %v1471 = vmin.f32 %v1343, 1.0
        %v1472 = vmin.f32 %v1344, 1.0
        %v1473 = vmin.f32 %v1345, 1.0
        %v1474 = vmin.f32 %v1346, 1.0
        %v1475 = vmin.f32 %v1347, 1.0
        %v1476 = vmin.f32 %v1348, 1.0
        %v1477 = vmin.f32 %v1349, 1.0
        %v1478 = vmin.f32 %v1350, 1.0
        %v1479 = vmin.f32 %v1351, 1.0
        %v1480 = vmin.f32 %v1352, 1.0
        %v1481 = vmin.f32 %v1353, 1.0
        %v1482 = vmin.f32 %v1354, 1.0
        %v1483 = vmin.f32 %v1355, 1.0
        %v1484 = vmin.f32 %v1356, 1.0
        %v1485 = vmin.f32 %v1357, 1.0
        %v1486 = vmin.f32 %v1358, 1.0
        %v1487 = vmin.f32 %v1359, 1.0
        %v1488 = vmin.f32 %v1360, 1.0
        %v1489 = vmin.f32 %v1361, 1.0
        %v1490 = vmin.f32 %v1362, 1.0
        %v1491 = vmin.f32 %v1363, 1.0
        %v1492 = vmin.f32 %v1364, 1.0
        %v1493 = vmin.f32 %v1365, 1.0
        %v1494 = vmin.f32 %v1366, 1.0
        %v1495 = vmin.f32 %v1367, 1.0
        %v1496 = vmin.f32 %v1368, 1.0
        %v1497 = vmin.f32 %v1369, 1.0
        %v1498 = vmin.f32 %v1370, 1.0
        %v1499 = vmin.f32 %v1371, 1.0
        %v1500 = vmin.f32 %v1372, 1.0
        %v1501 = vmin.f32 %v1373, 1.0
        %v1502 = vmin.f32 %v1374, 1.0
        %v1503 = vmin.f32 %v1375, 1.0
        %v1504 = vmin.f32 %v1376, 1.0
        %v1505 = vmin.f32 %v1377, 1.0
        %v1506 = vmin.f32 %v1378, 1.0
        %v1507 = vmin.f32 %v1379, 1.0
        %v1508 = vmin.f32 %v1380, 1.0
        %v1509 = vmin.f32 %v1381, 1.0
        %v1510 = vmin.f32 %v1382, 1.0
        %v1511 = vmin.f32 %v1383, 1.0
        %v1512 = vmin.f32 %v1384, 1.0
        %v1513 = vmin.f32 %v1385, 1.0
        %v1514 = vmin.f32 %v1386, 1.0
        %v1515 = vmin.f32 %v1387, 1.0
        %v1516 = vmin.f32 %v1388, 1.0
        %v1517 = vmin.f32 %v1389, 1.0
        %v1518 = vmin.f32 %v1390, 1.0
        %v1519 = vmin.f32 %v1391, 1.0
        %v1520 = vmin.f32 %v1392, 1.0
        %v1521 = vmin.f32 %v1393, 1.0
        %v1522 = vmin.f32 %v1394, 1.0
        %v1523 = vmin.f32 %v1395, 1.0
        %v1524 = vmin.f32 %v1396, 1.0
        %v1525 = vmin.f32 %v1397, 1.0
        %v1526 = vmin.f32 %v1398, 1.0
        %v1527 = vmin.f32 %v1399, 1.0
        %v1528 = vmin.f32 %v1400, 1.0
        %v1529 = vmin.f32 %v1401, 1.0
        %v1530 = vmin.f32 %v1402, 1.0
        %v1531 = vmin.f32 %v1403, 1.0
        %v1532 = vmin.f32 %v1404, 1.0
        %v1533 = vmin.f32 %v1405, 1.0
        %v1534 = vmin.f32 %v1406, 1.0
        %v1535 = vmin.f32 %v1407, 1.0
        %v1536 = vmin.f32 %v1408, 1.0
        %v1537 = vmin.f32 %v1409, 1.0
        %v1538 = vmin.f32 %v1410, 1.0
        %v1539 = vmin.f32 %v1411, 1.0
        %v1540 = vmin.f32 %v1412, 1.0
        %v1541 = vmin.f32 %v1413, 1.0
        %v1542 = vmin.f32 %v1414, 1.0
        %v1543 = vmin.f32 %v1415, 1.0
        %v1544 = vmin.f32 %v1416, 1.0
        %v1545 = vmin.f32 %v1417, 1.0
        %v1546 = vmin.f32 %v1418, 1.0
        %v1547 = vmin.f32 %v1419, 1.0
        %v1548 = vmin.f32 %v1420, 1.0
        %v1549 = vmin.f32 %v1421, 1.0
        %v1550 = vmin.f32 %v1422, 1.0
        %v1551 = vmin.f32 %v1423, 1.0
        %v1552 = vmin.f32 %v1424, 1.0
        %v1553 = vmin.f32 %v1425, 1.0
        %v1554 = vmin.f32 %v1426, 1.0
        %v1555 = vmin.f32 %v1427, 1.0
        %v1556 = vmin.f32 %v1428, 1.0
        %v1557 = vmin.f32 %v1429, 1.0
        %v1558 = vmin.f32 %v1430, 1.0
        %v1559 = vmin.f32 %v1431, 1.0
        %v1560 = vmin.f32 %v1432, 1.0
        %v1561 = vmin.f32 %v1433, 1.0
        %v1562 = vmin.f32 %v1434, 1.0
        %v1563 = vmin.f32 %v1435, 1.0
        %v1564 = vmin.f32 %v1436, 1.0
        %v1565 = vmin.f32 %v1437, 1.0
        %v1566 = vmin.f32 %v1438, 1.0
        %v1567 = vmin.f32 %v1439, 1.0
        %v1568 = vmin.f32 %v1440, 1.0
        %v1569 = vmin.f32 %v1441, 1.0
        %v1570 = vmin.f32 %v1442, 1.0
        %v1571 = vmin.f32 %v1443, 1.0
        %v1572 = vmin.f32 %v1444, 1.0
        %v1573 = vmin.f32 %v1445, 1.0
        %v1574 = vmin.f32 %v1446, 1.0
        %v1575 = vmin.f32 %v1447, 1.0
        %v1576 = vmin.f32 %v1448, 1.0
        %v1577 = vmin.f32 %v1449, 1.0
        %v1578 = vmin.f32 %v1450, 1.0
        %v1579 = vmin.f32 %v1451, 1.0
        %v1580 = vmin.f32 %v1452, 1.0
        %v1581 = vmin.f32 %v1453, 1.0
        %v1582 = vmin.f32 %v1454, 1.0
        %v1583 = vmin.f32 %v1455, 1.0
        %v1584 = vmin.f32 %v1456, 1.0
        %v1585 = vmin.f32 %v1457, 1.0
        %v1586 = vmin.f32 %v1458, 1.0
        %v1587 = vmin.f32 %v1459, 1.0
        %v1588 = vmin.f32 %v1460, 1.0
        %v1589 = vpack.c.bf16 %v1462, %v1461
        %v1590 = vpack.c.bf16 %v1464, %v1463
        %v1591 = vpack.c.bf16 %v1466, %v1465
        %v1592 = vpack.c.bf16 %v1468, %v1467
        %v1593 = vpack.c.bf16 %v1470, %v1469
        %v1594 = vpack.c.bf16 %v1472, %v1471
        %v1595 = vpack.c.bf16 %v1474, %v1473
        %v1596 = vpack.c.bf16 %v1476, %v1475
        %v1597 = vpack.c.bf16 %v1478, %v1477
        %v1598 = vpack.c.bf16 %v1480, %v1479
        %v1599 = vpack.c.bf16 %v1482, %v1481
        %v1600 = vpack.c.bf16 %v1484, %v1483
        %v1601 = vpack.c.bf16 %v1486, %v1485
        %v1602 = vpack.c.bf16 %v1488, %v1487
        %v1603 = vpack.c.bf16 %v1490, %v1489
        %v1604 = vpack.c.bf16 %v1492, %v1491
        %v1605 = vpack.c.bf16 %v1494, %v1493
        %v1606 = vpack.c.bf16 %v1496, %v1495
        %v1607 = vpack.c.bf16 %v1498, %v1497
        %v1608 = vpack.c.bf16 %v1500, %v1499
        %v1609 = vpack.c.bf16 %v1502, %v1501
        %v1610 = vpack.c.bf16 %v1504, %v1503
        %v1611 = vpack.c.bf16 %v1506, %v1505
        %v1612 = vpack.c.bf16 %v1508, %v1507
        %v1613 = vpack.c.bf16 %v1510, %v1509
        %v1614 = vpack.c.bf16 %v1512, %v1511
        %v1615 = vpack.c.bf16 %v1514, %v1513
        %v1616 = vpack.c.bf16 %v1516, %v1515
        %v1617 = vpack.c.bf16 %v1518, %v1517
        %v1618 = vpack.c.bf16 %v1520, %v1519
        %v1619 = vpack.c.bf16 %v1522, %v1521
        %v1620 = vpack.c.bf16 %v1524, %v1523
        %v1621 = vpack.c.bf16 %v1526, %v1525
        %v1622 = vpack.c.bf16 %v1528, %v1527
        %v1623 = vpack.c.bf16 %v1530, %v1529
        %v1624 = vpack.c.bf16 %v1532, %v1531
        %v1625 = vpack.c.bf16 %v1534, %v1533
        %v1626 = vpack.c.bf16 %v1536, %v1535
        %v1627 = vpack.c.bf16 %v1538, %v1537
        %v1628 = vpack.c.bf16 %v1540, %v1539
        %v1629 = vpack.c.bf16 %v1542, %v1541
        %v1630 = vpack.c.bf16 %v1544, %v1543
        %v1631 = vpack.c.bf16 %v1546, %v1545
        %v1632 = vpack.c.bf16 %v1548, %v1547
        %v1633 = vpack.c.bf16 %v1550, %v1549
        %v1634 = vpack.c.bf16 %v1552, %v1551
        %v1635 = vpack.c.bf16 %v1554, %v1553
        %v1636 = vpack.c.bf16 %v1556, %v1555
        %v1637 = vpack.c.bf16 %v1558, %v1557
        %v1638 = vpack.c.bf16 %v1560, %v1559
        %v1639 = vpack.c.bf16 %v1562, %v1561
        %v1640 = vpack.c.bf16 %v1564, %v1563
        %v1641 = vpack.c.bf16 %v1566, %v1565
        %v1642 = vpack.c.bf16 %v1568, %v1567
        %v1643 = vpack.c.bf16 %v1570, %v1569
        %v1644 = vpack.c.bf16 %v1572, %v1571
        %v1645 = vpack.c.bf16 %v1574, %v1573
        %v1646 = vpack.c.bf16 %v1576, %v1575
        %v1647 = vpack.c.bf16 %v1578, %v1577
        %v1648 = vpack.c.bf16 %v1580, %v1579
        %v1649 = vpack.c.bf16 %v1582, %v1581
        %v1650 = vpack.c.bf16 %v1584, %v1583
        %v1651 = vpack.c.bf16 %v1586, %v1585
        %v1652 = vpack.c.bf16 %v1588, %v1587
        %v1717 = vunpack.c.l.b16 %v1589
        %v1718 = vunpack.c.h.b16 %v1589
        %v1719 = vunpack.c.l.b16 %v1590
        %v1720 = vunpack.c.h.b16 %v1590
        %v1721 = vunpack.c.l.b16 %v1591
        %v1722 = vunpack.c.h.b16 %v1591
        %v1723 = vunpack.c.l.b16 %v1592
        %v1724 = vunpack.c.h.b16 %v1592
        %v1725 = vunpack.c.l.b16 %v1593
        %v1726 = vunpack.c.h.b16 %v1593
        %v1727 = vunpack.c.l.b16 %v1594
        %v1728 = vunpack.c.h.b16 %v1594
        %v1729 = vunpack.c.l.b16 %v1595
        %v1730 = vunpack.c.h.b16 %v1595
        %v1731 = vunpack.c.l.b16 %v1596
        %v1732 = vunpack.c.h.b16 %v1596
        %v1733 = vunpack.c.l.b16 %v1597
        %v1734 = vunpack.c.h.b16 %v1597
        %v1735 = vunpack.c.l.b16 %v1598
        %v1736 = vunpack.c.h.b16 %v1598
        %v1737 = vunpack.c.l.b16 %v1599
        %v1738 = vunpack.c.h.b16 %v1599
        %v1739 = vunpack.c.l.b16 %v1600
        %v1740 = vunpack.c.h.b16 %v1600
        %v1741 = vunpack.c.l.b16 %v1601
        %v1742 = vunpack.c.h.b16 %v1601
        %v1743 = vunpack.c.l.b16 %v1602
        %v1744 = vunpack.c.h.b16 %v1602
        %v1745 = vunpack.c.l.b16 %v1603
        %v1746 = vunpack.c.h.b16 %v1603
        %v1747 = vunpack.c.l.b16 %v1604
        %v1748 = vunpack.c.h.b16 %v1604
        %v1749 = vunpack.c.l.b16 %v1605
        %v1750 = vunpack.c.h.b16 %v1605
        %v1751 = vunpack.c.l.b16 %v1606
        %v1752 = vunpack.c.h.b16 %v1606
        %v1753 = vunpack.c.l.b16 %v1607
        %v1754 = vunpack.c.h.b16 %v1607
        %v1755 = vunpack.c.l.b16 %v1608
        %v1756 = vunpack.c.h.b16 %v1608
        %v1757 = vunpack.c.l.b16 %v1609
        %v1758 = vunpack.c.h.b16 %v1609
        %v1759 = vunpack.c.l.b16 %v1610
        %v1760 = vunpack.c.h.b16 %v1610
        %v1761 = vunpack.c.l.b16 %v1611
        %v1762 = vunpack.c.h.b16 %v1611
        %v1763 = vunpack.c.l.b16 %v1612
        %v1764 = vunpack.c.h.b16 %v1612
        %v1765 = vunpack.c.l.b16 %v1613
        %v1766 = vunpack.c.h.b16 %v1613
        %v1767 = vunpack.c.l.b16 %v1614
        %v1768 = vunpack.c.h.b16 %v1614
        %v1769 = vunpack.c.l.b16 %v1615
        %v1770 = vunpack.c.h.b16 %v1615
        %v1771 = vunpack.c.l.b16 %v1616
        %v1772 = vunpack.c.h.b16 %v1616
        %v1773 = vunpack.c.l.b16 %v1617
        %v1774 = vunpack.c.h.b16 %v1617
        %v1775 = vunpack.c.l.b16 %v1618
        %v1776 = vunpack.c.h.b16 %v1618
        %v1777 = vunpack.c.l.b16 %v1619
        %v1778 = vunpack.c.h.b16 %v1619
        %v1779 = vunpack.c.l.b16 %v1620
        %v1780 = vunpack.c.h.b16 %v1620
        %v1781 = vunpack.c.l.b16 %v1621
        %v1782 = vunpack.c.h.b16 %v1621
        %v1783 = vunpack.c.l.b16 %v1622
        %v1784 = vunpack.c.h.b16 %v1622
        %v1785 = vunpack.c.l.b16 %v1623
        %v1786 = vunpack.c.h.b16 %v1623
        %v1787 = vunpack.c.l.b16 %v1624
        %v1788 = vunpack.c.h.b16 %v1624
        %v1789 = vunpack.c.l.b16 %v1625
        %v1790 = vunpack.c.h.b16 %v1625
        %v1791 = vunpack.c.l.b16 %v1626
        %v1792 = vunpack.c.h.b16 %v1626
        %v1793 = vunpack.c.l.b16 %v1627
        %v1794 = vunpack.c.h.b16 %v1627
        %v1795 = vunpack.c.l.b16 %v1628
        %v1796 = vunpack.c.h.b16 %v1628
        %v1797 = vunpack.c.l.b16 %v1629
        %v1798 = vunpack.c.h.b16 %v1629
        %v1799 = vunpack.c.l.b16 %v1630
        %v1800 = vunpack.c.h.b16 %v1630
        %v1801 = vunpack.c.l.b16 %v1631
        %v1802 = vunpack.c.h.b16 %v1631
        %v1803 = vunpack.c.l.b16 %v1632
        %v1804 = vunpack.c.h.b16 %v1632
        %v1805 = vunpack.c.l.b16 %v1633
        %v1806 = vunpack.c.h.b16 %v1633
        %v1807 = vunpack.c.l.b16 %v1634
        %v1808 = vunpack.c.h.b16 %v1634
        %v1809 = vunpack.c.l.b16 %v1635
        %v1810 = vunpack.c.h.b16 %v1635
        %v1811 = vunpack.c.l.b16 %v1636
        %v1812 = vunpack.c.h.b16 %v1636
        %v1813 = vunpack.c.l.b16 %v1637
        %v1814 = vunpack.c.h.b16 %v1637
        %v1815 = vunpack.c.l.b16 %v1638
        %v1816 = vunpack.c.h.b16 %v1638
        %v1817 = vunpack.c.l.b16 %v1639
        %v1818 = vunpack.c.h.b16 %v1639
        %v1819 = vunpack.c.l.b16 %v1640
        %v1820 = vunpack.c.h.b16 %v1640
        %v1821 = vunpack.c.l.b16 %v1641
        %v1822 = vunpack.c.h.b16 %v1641
        %v1823 = vunpack.c.l.b16 %v1642
        %v1824 = vunpack.c.h.b16 %v1642
        %v1825 = vunpack.c.l.b16 %v1643
        %v1826 = vunpack.c.h.b16 %v1643
        %v1827 = vunpack.c.l.b16 %v1644
        %v1828 = vunpack.c.h.b16 %v1644
        %v1829 = vunpack.c.l.b16 %v1645
        %v1830 = vunpack.c.h.b16 %v1645
        %v1831 = vunpack.c.l.b16 %v1646
        %v1832 = vunpack.c.h.b16 %v1646
        %v1833 = vunpack.c.l.b16 %v1647
        %v1834 = vunpack.c.h.b16 %v1647
        %v1835 = vunpack.c.l.b16 %v1648
        %v1836 = vunpack.c.h.b16 %v1648
        %v1837 = vunpack.c.l.b16 %v1649
        %v1838 = vunpack.c.h.b16 %v1649
        %v1839 = vunpack.c.l.b16 %v1650
        %v1840 = vunpack.c.h.b16 %v1650
        %v1841 = vunpack.c.l.b16 %v1651
        %v1842 = vunpack.c.h.b16 %v1651
        %v1843 = vunpack.c.l.b16 %v1652
        %v1844 = vunpack.c.h.b16 %v1652
        %v1845 = vpack.c.b16 %v1717, %v1717
        %v1846 = vpack.c.b16 %v1718, %v1718
        %v1847 = vpack.c.b16 %v1719, %v1719
        %v1848 = vpack.c.b16 %v1720, %v1720
        %v1849 = vpack.c.b16 %v1721, %v1721
        %v1850 = vpack.c.b16 %v1722, %v1722
        %v1851 = vpack.c.b16 %v1723, %v1723
        %v1852 = vpack.c.b16 %v1724, %v1724
        %v1853 = vpack.c.b16 %v1725, %v1725
        %v1854 = vpack.c.b16 %v1726, %v1726
        %v1855 = vpack.c.b16 %v1727, %v1727
        %v1856 = vpack.c.b16 %v1728, %v1728
        %v1857 = vpack.c.b16 %v1729, %v1729
        %v1858 = vpack.c.b16 %v1730, %v1730
        %v1859 = vpack.c.b16 %v1731, %v1731
        %v1860 = vpack.c.b16 %v1732, %v1732
        %v1861 = vpack.c.b16 %v1733, %v1733
        %v1862 = vpack.c.b16 %v1734, %v1734
        %v1863 = vpack.c.b16 %v1735, %v1735
        %v1864 = vpack.c.b16 %v1736, %v1736
        %v1865 = vpack.c.b16 %v1737, %v1737
        %v1866 = vpack.c.b16 %v1738, %v1738
        %v1867 = vpack.c.b16 %v1739, %v1739
        %v1868 = vpack.c.b16 %v1740, %v1740
        %v1869 = vpack.c.b16 %v1741, %v1741
        %v1870 = vpack.c.b16 %v1742, %v1742
        %v1871 = vpack.c.b16 %v1743, %v1743
        %v1872 = vpack.c.b16 %v1744, %v1744
        %v1873 = vpack.c.b16 %v1745, %v1745
        %v1874 = vpack.c.b16 %v1746, %v1746
        %v1875 = vpack.c.b16 %v1747, %v1747
        %v1876 = vpack.c.b16 %v1748, %v1748
        %v1877 = vpack.c.b16 %v1749, %v1749
        %v1878 = vpack.c.b16 %v1750, %v1750
        %v1879 = vpack.c.b16 %v1751, %v1751
        %v1880 = vpack.c.b16 %v1752, %v1752
        %v1881 = vpack.c.b16 %v1753, %v1753
        %v1882 = vpack.c.b16 %v1754, %v1754
        %v1883 = vpack.c.b16 %v1755, %v1755
        %v1884 = vpack.c.b16 %v1756, %v1756
        %v1885 = vpack.c.b16 %v1757, %v1757
        %v1886 = vpack.c.b16 %v1758, %v1758
        %v1887 = vpack.c.b16 %v1759, %v1759
        %v1888 = vpack.c.b16 %v1760, %v1760
        %v1889 = vpack.c.b16 %v1761, %v1761
        %v1890 = vpack.c.b16 %v1762, %v1762
        %v1891 = vpack.c.b16 %v1763, %v1763
        %v1892 = vpack.c.b16 %v1764, %v1764
        %v1893 = vpack.c.b16 %v1765, %v1765
        %v1894 = vpack.c.b16 %v1766, %v1766
        %v1895 = vpack.c.b16 %v1767, %v1767
        %v1896 = vpack.c.b16 %v1768, %v1768
        %v1897 = vpack.c.b16 %v1769, %v1769
        %v1898 = vpack.c.b16 %v1770, %v1770
        %v1899 = vpack.c.b16 %v1771, %v1771
        %v1900 = vpack.c.b16 %v1772, %v1772
        %v1901 = vpack.c.b16 %v1773, %v1773
        %v1902 = vpack.c.b16 %v1774, %v1774
        %v1903 = vpack.c.b16 %v1775, %v1775
        %v1904 = vpack.c.b16 %v1776, %v1776
        %v1905 = vpack.c.b16 %v1777, %v1777
        %v1906 = vpack.c.b16 %v1778, %v1778
        %v1907 = vpack.c.b16 %v1779, %v1779
        %v1908 = vpack.c.b16 %v1780, %v1780
        %v1909 = vpack.c.b16 %v1781, %v1781
        %v1910 = vpack.c.b16 %v1782, %v1782
        %v1911 = vpack.c.b16 %v1783, %v1783
        %v1912 = vpack.c.b16 %v1784, %v1784
        %v1913 = vpack.c.b16 %v1785, %v1785
        %v1914 = vpack.c.b16 %v1786, %v1786
        %v1915 = vpack.c.b16 %v1787, %v1787
        %v1916 = vpack.c.b16 %v1788, %v1788
        %v1917 = vpack.c.b16 %v1789, %v1789
        %v1918 = vpack.c.b16 %v1790, %v1790
        %v1919 = vpack.c.b16 %v1791, %v1791
        %v1920 = vpack.c.b16 %v1792, %v1792
        %v1921 = vpack.c.b16 %v1793, %v1793
        %v1922 = vpack.c.b16 %v1794, %v1794
        %v1923 = vpack.c.b16 %v1795, %v1795
        %v1924 = vpack.c.b16 %v1796, %v1796
        %v1925 = vpack.c.b16 %v1797, %v1797
        %v1926 = vpack.c.b16 %v1798, %v1798
        %v1927 = vpack.c.b16 %v1799, %v1799
        %v1928 = vpack.c.b16 %v1800, %v1800
        %v1929 = vpack.c.b16 %v1801, %v1801
        %v1930 = vpack.c.b16 %v1802, %v1802
        %v1931 = vpack.c.b16 %v1803, %v1803
        %v1932 = vpack.c.b16 %v1804, %v1804
        %v1933 = vpack.c.b16 %v1805, %v1805
        %v1934 = vpack.c.b16 %v1806, %v1806
        %v1935 = vpack.c.b16 %v1807, %v1807
        %v1936 = vpack.c.b16 %v1808, %v1808
        %v1937 = vpack.c.b16 %v1809, %v1809
        %v1938 = vpack.c.b16 %v1810, %v1810
        %v1939 = vpack.c.b16 %v1811, %v1811
        %v1940 = vpack.c.b16 %v1812, %v1812
        %v1941 = vpack.c.b16 %v1813, %v1813
        %v1942 = vpack.c.b16 %v1814, %v1814
        %v1943 = vpack.c.b16 %v1815, %v1815
        %v1944 = vpack.c.b16 %v1816, %v1816
        %v1945 = vpack.c.b16 %v1817, %v1817
        %v1946 = vpack.c.b16 %v1818, %v1818
        %v1947 = vpack.c.b16 %v1819, %v1819
        %v1948 = vpack.c.b16 %v1820, %v1820
        %v1949 = vpack.c.b16 %v1821, %v1821
        %v1950 = vpack.c.b16 %v1822, %v1822
        %v1951 = vpack.c.b16 %v1823, %v1823
        %v1952 = vpack.c.b16 %v1824, %v1824
        %v1953 = vpack.c.b16 %v1825, %v1825
        %v1954 = vpack.c.b16 %v1826, %v1826
        %v1955 = vpack.c.b16 %v1827, %v1827
        %v1956 = vpack.c.b16 %v1828, %v1828
        %v1957 = vpack.c.b16 %v1829, %v1829
        %v1958 = vpack.c.b16 %v1830, %v1830
        %v1959 = vpack.c.b16 %v1831, %v1831
        %v1960 = vpack.c.b16 %v1832, %v1832
        %v1961 = vpack.c.b16 %v1833, %v1833
        %v1962 = vpack.c.b16 %v1834, %v1834
        %v1963 = vpack.c.b16 %v1835, %v1835
        %v1964 = vpack.c.b16 %v1836, %v1836
        %v1965 = vpack.c.b16 %v1837, %v1837
        %v1966 = vpack.c.b16 %v1838, %v1838
        %v1967 = vpack.c.b16 %v1839, %v1839
        %v1968 = vpack.c.b16 %v1840, %v1840
        %v1969 = vpack.c.b16 %v1841, %v1841
        %v1970 = vpack.c.b16 %v1842, %v1842
        %v1971 = vpack.c.b16 %v1843, %v1843
        %v1972 = vpack.c.b16 %v1844, %v1844
        %2101 = vst [vmem:[%s203] sm:$0xf] %v1845
        %2102 = vst [vmem:[%s203 + $0x4] sm:$0xf] %v1846
        %2103 = vst [vmem:[%s203 + $0x8] sm:$0xf] %v1847
        %2104 = vst [vmem:[%s203 + $0xc] sm:$0xf] %v1848
        %2105 = vst [vmem:[%s203 + $0x10] sm:$0xf] %v1849
        %2106 = vst [vmem:[%s203 + $0x14] sm:$0xf] %v1850
        %2107 = vst [vmem:[%s203 + $0x18] sm:$0xf] %v1851
        %2108 = vst [vmem:[%s203 + $0x1c] sm:$0xf] %v1852
        %2109 = vst [vmem:[%s203 + $0x20] sm:$0xf] %v1853
        %2110 = vst [vmem:[%s203 + $0x24] sm:$0xf] %v1854
        %2111 = vst [vmem:[%s203 + $0x28] sm:$0xf] %v1855
        %2112 = vst [vmem:[%s203 + $0x2c] sm:$0xf] %v1856
        %2113 = vst [vmem:[%s203 + $0x30] sm:$0xf] %v1857
        %2114 = vst [vmem:[%s203 + $0x34] sm:$0xf] %v1858
        %2115 = vst [vmem:[%s203 + $0x38] sm:$0xf] %v1859
        %2116 = vst [vmem:[%s203 + $0x3c] sm:$0xf] %v1860
        %2117 = vst [vmem:[%s203 + $0x40] sm:$0xf] %v1861
        %2118 = vst [vmem:[%s203 + $0x44] sm:$0xf] %v1862
        %2119 = vst [vmem:[%s203 + $0x48] sm:$0xf] %v1863
        %2120 = vst [vmem:[%s203 + $0x4c] sm:$0xf] %v1864
        %2121 = vst [vmem:[%s203 + $0x50] sm:$0xf] %v1865
        %2122 = vst [vmem:[%s203 + $0x54] sm:$0xf] %v1866
        %2123 = vst [vmem:[%s203 + $0x58] sm:$0xf] %v1867
        %2124 = vst [vmem:[%s203 + $0x5c] sm:$0xf] %v1868
        %2125 = vst [vmem:[%s203 + $0x60] sm:$0xf] %v1869
        %2126 = vst [vmem:[%s203 + $0x64] sm:$0xf] %v1870
        %2127 = vst [vmem:[%s203 + $0x68] sm:$0xf] %v1871
        %2128 = vst [vmem:[%s203 + $0x6c] sm:$0xf] %v1872
        %2129 = vst [vmem:[%s203 + $0x70] sm:$0xf] %v1873
        %2130 = vst [vmem:[%s203 + $0x74] sm:$0xf] %v1874
        %2131 = vst [vmem:[%s203 + $0x78] sm:$0xf] %v1875
        %2132 = vst [vmem:[%s203 + $0x7c] sm:$0xf] %v1876
        %2133 = vst [vmem:[%s203 + $0x80] sm:$0xf] %v1877
        %2134 = vst [vmem:[%s203 + $0x84] sm:$0xf] %v1878
        %2135 = vst [vmem:[%s203 + $0x88] sm:$0xf] %v1879
        %2136 = vst [vmem:[%s203 + $0x8c] sm:$0xf] %v1880
        %2137 = vst [vmem:[%s203 + $0x90] sm:$0xf] %v1881
        %2138 = vst [vmem:[%s203 + $0x94] sm:$0xf] %v1882
        %2139 = vst [vmem:[%s203 + $0x98] sm:$0xf] %v1883
        %2140 = vst [vmem:[%s203 + $0x9c] sm:$0xf] %v1884
        %2141 = vst [vmem:[%s203 + $0xa0] sm:$0xf] %v1885
        %2142 = vst [vmem:[%s203 + $0xa4] sm:$0xf] %v1886
        %2143 = vst [vmem:[%s203 + $0xa8] sm:$0xf] %v1887
        %2144 = vst [vmem:[%s203 + $0xac] sm:$0xf] %v1888
        %2145 = vst [vmem:[%s203 + $0xb0] sm:$0xf] %v1889
        %2146 = vst [vmem:[%s203 + $0xb4] sm:$0xf] %v1890
        %2147 = vst [vmem:[%s203 + $0xb8] sm:$0xf] %v1891
        %2148 = vst [vmem:[%s203 + $0xbc] sm:$0xf] %v1892
        %2149 = vst [vmem:[%s203 + $0xc0] sm:$0xf] %v1893
        %2150 = vst [vmem:[%s203 + $0xc4] sm:$0xf] %v1894
        %2151 = vst [vmem:[%s203 + $0xc8] sm:$0xf] %v1895
        %2152 = vst [vmem:[%s203 + $0xcc] sm:$0xf] %v1896
        %2153 = vst [vmem:[%s203 + $0xd0] sm:$0xf] %v1897
        %2154 = vst [vmem:[%s203 + $0xd4] sm:$0xf] %v1898
        %2155 = vst [vmem:[%s203 + $0xd8] sm:$0xf] %v1899
        %2156 = vst [vmem:[%s203 + $0xdc] sm:$0xf] %v1900
        %2157 = vst [vmem:[%s203 + $0xe0] sm:$0xf] %v1901
        %2158 = vst [vmem:[%s203 + $0xe4] sm:$0xf] %v1902
        %2159 = vst [vmem:[%s203 + $0xe8] sm:$0xf] %v1903
        %2160 = vst [vmem:[%s203 + $0xec] sm:$0xf] %v1904
        %2161 = vst [vmem:[%s203 + $0xf0] sm:$0xf] %v1905
        %2162 = vst [vmem:[%s203 + $0xf4] sm:$0xf] %v1906
        %2163 = vst [vmem:[%s203 + $0xf8] sm:$0xf] %v1907
        %2164 = vst [vmem:[%s203 + $0xfc] sm:$0xf] %v1908
        %2165 = vst [vmem:[%s203 + $0x100] sm:$0xf] %v1909
        %2166 = vst [vmem:[%s203 + $0x104] sm:$0xf] %v1910
        %2167 = vst [vmem:[%s203 + $0x108] sm:$0xf] %v1911
        %2168 = vst [vmem:[%s203 + $0x10c] sm:$0xf] %v1912
        %2169 = vst [vmem:[%s203 + $0x110] sm:$0xf] %v1913
        %2170 = vst [vmem:[%s203 + $0x114] sm:$0xf] %v1914
        %2171 = vst [vmem:[%s203 + $0x118] sm:$0xf] %v1915
        %2172 = vst [vmem:[%s203 + $0x11c] sm:$0xf] %v1916
        %2173 = vst [vmem:[%s203 + $0x120] sm:$0xf] %v1917
        %2174 = vst [vmem:[%s203 + $0x124] sm:$0xf] %v1918
        %2175 = vst [vmem:[%s203 + $0x128] sm:$0xf] %v1919
        %2176 = vst [vmem:[%s203 + $0x12c] sm:$0xf] %v1920
        %2177 = vst [vmem:[%s203 + $0x130] sm:$0xf] %v1921
        %2178 = vst [vmem:[%s203 + $0x134] sm:$0xf] %v1922
        %2179 = vst [vmem:[%s203 + $0x138] sm:$0xf] %v1923
        %2180 = vst [vmem:[%s203 + $0x13c] sm:$0xf] %v1924
        %2181 = vst [vmem:[%s203 + $0x140] sm:$0xf] %v1925
        %2182 = vst [vmem:[%s203 + $0x144] sm:$0xf] %v1926
        %2183 = vst [vmem:[%s203 + $0x148] sm:$0xf] %v1927
        %2184 = vst [vmem:[%s203 + $0x14c] sm:$0xf] %v1928
        %2185 = vst [vmem:[%s203 + $0x150] sm:$0xf] %v1929
        %2186 = vst [vmem:[%s203 + $0x154] sm:$0xf] %v1930
        %2187 = vst [vmem:[%s203 + $0x158] sm:$0xf] %v1931
        %2188 = vst [vmem:[%s203 + $0x15c] sm:$0xf] %v1932
        %2189 = vst [vmem:[%s203 + $0x160] sm:$0xf] %v1933
        %2190 = vst [vmem:[%s203 + $0x164] sm:$0xf] %v1934
        %2191 = vst [vmem:[%s203 + $0x168] sm:$0xf] %v1935
        %2192 = vst [vmem:[%s203 + $0x16c] sm:$0xf] %v1936
        %2193 = vst [vmem:[%s203 + $0x170] sm:$0xf] %v1937
        %2194 = vst [vmem:[%s203 + $0x174] sm:$0xf] %v1938
        %2195 = vst [vmem:[%s203 + $0x178] sm:$0xf] %v1939
        %2196 = vst [vmem:[%s203 + $0x17c] sm:$0xf] %v1940
        %2197 = vst [vmem:[%s203 + $0x180] sm:$0xf] %v1941
        %2198 = vst [vmem:[%s203 + $0x184] sm:$0xf] %v1942
        %2199 = vst [vmem:[%s203 + $0x188] sm:$0xf] %v1943
        %2200 = vst [vmem:[%s203 + $0x18c] sm:$0xf] %v1944
        %2201 = vst [vmem:[%s203 + $0x190] sm:$0xf] %v1945
        %2202 = vst [vmem:[%s203 + $0x194] sm:$0xf] %v1946
        %2203 = vst [vmem:[%s203 + $0x198] sm:$0xf] %v1947
        %2204 = vst [vmem:[%s203 + $0x19c] sm:$0xf] %v1948
        %2205 = vst [vmem:[%s203 + $0x1a0] sm:$0xf] %v1949
        %2206 = vst [vmem:[%s203 + $0x1a4] sm:$0xf] %v1950
        %2207 = vst [vmem:[%s203 + $0x1a8] sm:$0xf] %v1951
        %2208 = vst [vmem:[%s203 + $0x1ac] sm:$0xf] %v1952
        %2209 = vst [vmem:[%s203 + $0x1b0] sm:$0xf] %v1953
        %2210 = vst [vmem:[%s203 + $0x1b4] sm:$0xf] %v1954
        %2211 = vst [vmem:[%s203 + $0x1b8] sm:$0xf] %v1955
        %2212 = vst [vmem:[%s203 + $0x1bc] sm:$0xf] %v1956
        %2213 = vst [vmem:[%s203 + $0x1c0] sm:$0xf] %v1957
        %2214 = vst [vmem:[%s203 + $0x1c4] sm:$0xf] %v1958
        %2215 = vst [vmem:[%s203 + $0x1c8] sm:$0xf] %v1959
        %2216 = vst [vmem:[%s203 + $0x1cc] sm:$0xf] %v1960
        %2217 = vst [vmem:[%s203 + $0x1d0] sm:$0xf] %v1961
        %2218 = vst [vmem:[%s203 + $0x1d4] sm:$0xf] %v1962
        %2219 = vst [vmem:[%s203 + $0x1d8] sm:$0xf] %v1963
        %2220 = vst [vmem:[%s203 + $0x1dc] sm:$0xf] %v1964
        %2221 = vst [vmem:[%s203 + $0x1e0] sm:$0xf] %v1965
        %2222 = vst [vmem:[%s203 + $0x1e4] sm:$0xf] %v1966
        %2223 = vst [vmem:[%s203 + $0x1e8] sm:$0xf] %v1967
        %2224 = vst [vmem:[%s203 + $0x1ec] sm:$0xf] %v1968
        %2225 = vst [vmem:[%s203 + $0x1f0] sm:$0xf] %v1969
        %2226 = vst [vmem:[%s203 + $0x1f4] sm:$0xf] %v1970
        %2227 = vst [vmem:[%s203 + $0x1f8] sm:$0xf] %v1971
        %2228 = vst [vmem:[%s203 + $0x1fc] sm:$0xf] %v1972
        %s2229 = sand.u32 %s97, 1
        %s2230 = scalar_lea.sflag [#allocation4], %s2229
        %s2231 = sand.u32 %s97, 1
        %s2232 = smul.addr %s2231, 512
        %s2233 = scalar_lea.vmem [#allocation7], %s2232
        // Predicated region
        $region41: #{tpu_custom_call.1} parent=31 // pred_check
          %p2234 = pneg %p107
        $region42: #{tpu_custom_call.1} parent=31 // pred_check_branch
          %2236 = sbr.rel (%p2234) target = $region44
        $region43: #{tpu_custom_call.1} parent=31 // pred_region
          %s2238 = ssub.s32 8192, 8192
          %2239 = vsyncadd %s2230, %s2238
          %s2240 = smul.addr %s21, 128
          %s2241 = smul.addr %s2240, 64
          %s2242 = scalar_lea.hbm %s3, %s2241
          %s2243 = sshll.u32 %s2233, 4
          %s2244 = int_to_ptr.vmem [resolvable:$true] %s2243
          %2249 = dma.vmem_to_hbm [thread:$0]  %s2244, 8192, %s2242, %s2230, 64, 64, 4
        $region44: #{tpu_custom_call.1} parent=31 // pred_fallthru
          _
      $region32: #{tpu_custom_call.1} parent=5 // pred_fallthru
        _
      %p2250 = scmp.le.s32.totalorder 2, %s16
      // Predicated region
      $region45: #{tpu_custom_call.1} parent=5 // pred_check
        %p2251 = pneg %p2250
      $region46: #{tpu_custom_call.1} parent=5 // pred_check_branch
        %2253 = sbr.rel (%p2251) target = $region48
      $region47: #{tpu_custom_call.1} parent=5 // pred_region
        %s2254 = ssub.s32 %s16, 2
        // Predicated region
        $region49: #{tpu_custom_call.1} parent=47 // pred_check
          %p2255 = pneg %p113
        $region50: #{tpu_custom_call.1} parent=47 // pred_check_branch
          %2257 = sbr.rel (%p2255) target = $region52
        $region51: #{tpu_custom_call.1} parent=47 // pred_region
          %s2258 = sand.u32 %s98, 1
          %s2259 = scalar_lea.sflag [#allocation4], %s2258
          %s2260 = sand.u32 %s98, 1
          %s2261 = smul.addr %s2260, 512
          %s2262 = scalar_lea.vmem [#allocation7], %s2261
          %2263 = dma.done %s2259, 8192
        $region52: #{tpu_custom_call.1} parent=47 // pred_fallthru
          _
      $region48: #{tpu_custom_call.1} parent=5 // pred_fallthru
        _
    $region6: #{tpu_custom_call.1} parent=1 // loop_footer
      %s20 = sadd.s32 1, %s16
    $region7: #{tpu_custom_call.1} parent=1 // loop_footer_branch
      %15 = sbr.rel target = $region3
    $region8: #{tpu_custom_call.1} parent=1 // loop_exit
      _
    %2264 = vsyncpa [#allocation3], 1
    %s2265 = scalar_lea.sflag [#allocation3], 1
    %2266 = vsyncpa %s2265, 1
    %2267 = vsyncpa [#allocation6], 1
    %2268 = vsyncpa [#allocation4], 1
    %s2269 = scalar_lea.sflag [#allocation4], 1
    %2270 = vsyncpa %s2269, 1

</llo_original>
